<compile_context>
chip_gen: v5e
topology: v5e:2x2
jax: 0.10.0
libtpu: 0.0.40
codegen_flags: <defaults>
</compile_context>

<pallas_src>
import functools

import jax
import jax.numpy as jnp
import numpy as np
from jax.experimental import pallas as pl
from jax.experimental.pallas import tpu as pltpu

HIDDEN = 400       # logical hidden size (matches the PyTorch module)
HIDDEN_PAD = 512   # lane-aligned padded hidden size used on-chip


def critic_kernel(state_ref, action_ref,
                  w14s_ref, w14a_ref, b14_ref,
                  w25_ref, b25_ref,
                  w36_ref, b36_ref,
                  out_ref):
    H = w25_ref.shape[-1]

    # ---- fused layer 1 of both heads: [h|g] = relu([s|a] @ [w1|w4] + [b1|b4])
    #      (state/action kept separate -> no host-side concat; sum 2 matmuls)
    s16 = state_ref[...].astype(jnp.bfloat16)
    a16 = action_ref[...].astype(jnp.bfloat16)
    hg = (jnp.dot(s16, w14s_ref[...], preferred_element_type=jnp.float32)
          + jnp.dot(a16, w14a_ref[...], preferred_element_type=jnp.float32)
          + b14_ref[...])
    hg = jnp.maximum(hg, 0.0)
    h = hg[:, :H]            # static, 128-aligned lane slices
    g = hg[:, H:]

    # ---- layer 2 (block-diagonal across heads -> two matmuls)
    h2 = jnp.dot(h.astype(jnp.bfloat16), w25_ref[0],
                 preferred_element_type=jnp.float32) + b25_ref[:, :H]
    g2 = jnp.dot(g.astype(jnp.bfloat16), w25_ref[1],
                 preferred_element_type=jnp.float32) + b25_ref[:, H:]
    h2 = jnp.maximum(h2, 0.0)
    g2 = jnp.maximum(g2, 0.0)

    # ---- layer 3: (H -> 1) per head on the VPU/XLU (skip two N=1 MXU ops)
    q1 = jnp.sum(h2 * w36_ref[0:1, :], axis=-1, keepdims=True)
    q2 = jnp.sum(g2 * w36_ref[1:2, :], axis=-1, keepdims=True)
    out_ref[...] = jnp.concatenate([q1, q2], axis=1) + b36_ref[...]


def critic_forward(state, action, params, *, batch_tile=256):
    """Pallas equivalent of Critic.forward: returns (q1, q2), each (B, 1)."""
    B, S = state.shape
    A = action.shape[1]
    H = params["w25"].shape[-1]

    if B >= batch_tile and B % batch_tile == 0:
        TB = batch_tile     # large batch: pipeline over batch tiles
    else:
        TB = B              # small / ragged batch: single tile
    grid = (B // TB,)

    w_map2 = lambda i: (0, 0)       # weights resident across batch tiles
    w_map3 = lambda i: (0, 0, 0)

    out = pl.pallas_call(
        critic_kernel,
        out_shape=jax.ShapeDtypeStruct((B, 2), jnp.float32),
        grid=grid,
        in_specs=[
            pl.BlockSpec((TB, S), lambda i: (i, 0)),
            pl.BlockSpec((TB, A), lambda i: (i, 0)),
            pl.BlockSpec((S, 2 * H), w_map2),
            pl.BlockSpec((A, 2 * H), w_map2),
            pl.BlockSpec((1, 2 * H), w_map2),
            pl.BlockSpec((2, H, H), w_map3),
            pl.BlockSpec((1, 2 * H), w_map2),
            pl.BlockSpec((2, H), w_map2),
            pl.BlockSpec((1, 2), w_map2),
        ],
        out_specs=pl.BlockSpec((TB, 2), lambda i: (i, 0)),
        compiler_params=pltpu.CompilerParams(
            dimension_semantics=("parallel",)),
    )(state, action,
      params["w14s"], params["w14a"], params["b14"],
      params["w25"], params["b25"],
      params["w36"], params["b36"])
    return out[:, 0:1], out[:, 1:2]


def init_raw_params(key, state_dim, action_dim, hidden=HIDDEN):
    """PyTorch-Linear-like uniform fan-in init; weights stored (in, out)."""
    in_dim = state_dim + action_dim
    dims = [(in_dim, hidden), (hidden, hidden), (hidden, 1),   # Q1: l1,l2,l3
            (in_dim, hidden), (hidden, hidden), (hidden, 1)]   # Q2: l4,l5,l6
    raw = {}
    for i, (fan_in, fan_out) in enumerate(dims, start=1):
        key, kw, kb = jax.random.split(key, 3)
        bound = 1.0 / float(np.sqrt(fan_in))
        raw[f"w{i}"] = jax.random.uniform(kw, (fan_in, fan_out), jnp.float32,
                                          -bound, bound)
        raw[f"b{i}"] = jax.random.uniform(kb, (1, fan_out), jnp.float32,
                                          -bound, bound)
    return raw


def pack_params(raw, state_dim, action_dim,
                hidden=HIDDEN, hidden_pad=HIDDEN_PAD):
    """Zero-pad hidden to 512, fuse heads, cast MXU weights to bf16."""
    hp = hidden_pad - hidden

    w1 = jnp.pad(raw["w1"], ((0, 0), (0, hp)))
    w4 = jnp.pad(raw["w4"], ((0, 0), (0, hp)))
    w2 = jnp.pad(raw["w2"], ((0, hp), (0, hp)))
    w5 = jnp.pad(raw["w5"], ((0, hp), (0, hp)))
    w3 = jnp.pad(raw["w3"], ((0, hp), (0, 0)))
    w6 = jnp.pad(raw["w6"], ((0, hp), (0, 0)))
    b1 = jnp.pad(raw["b1"], ((0, 0), (0, hp)))
    b4 = jnp.pad(raw["b4"], ((0, 0), (0, hp)))
    b2 = jnp.pad(raw["b2"], ((0, 0), (0, hp)))
    b5 = jnp.pad(raw["b5"], ((0, 0), (0, hp)))

    w14 = jnp.concatenate([w1, w4], axis=1)                       # (in, 2*Hp)
    return {
        "w14s": w14[:state_dim].astype(jnp.bfloat16),             # (S, 2*Hp)
        "w14a": w14[state_dim:].astype(jnp.bfloat16),             # (A, 2*Hp)
        "b14": jnp.concatenate([b1, b4], axis=1),                 # (1, 2*Hp)
        "w25": jnp.stack([w2, w5], axis=0).astype(jnp.bfloat16),  # (2, Hp, Hp)
        "b25": jnp.concatenate([b2, b5], axis=1),                 # (1, 2*Hp)
        "w36": jnp.concatenate([w3.T, w6.T], axis=0),             # (2, Hp) f32
        "b36": jnp.concatenate([raw["b3"], raw["b6"]], axis=1),   # (1, 2) f32
    }


def critic_reference(state, action, raw):
    """Plain-JAX reference using the raw (unpacked) weights, mimicking the
    kernel's bf16-at-the-MXU quantization with f32 accumulation."""
    q = lambda x: x.astype(jnp.bfloat16).astype(jnp.float32)
    dot = functools.partial(jnp.dot, precision="highest")
    sa = jnp.concatenate([state, action], axis=1)
    h = jax.nn.relu(dot(q(sa), q(raw["w1"])) + raw["b1"])
    h = jax.nn.relu(dot(q(h), q(raw["w2"])) + raw["b2"])
    q1 = dot(h, raw["w3"]) + raw["b3"]
    g = jax.nn.relu(dot(q(sa), q(raw["w4"])) + raw["b4"])
    g = jax.nn.relu(dot(q(g), q(raw["w5"])) + raw["b5"])
    q2 = dot(g, raw["w6"]) + raw["b6"]
    return q1, q2


if __name__ == "__main__":
    batch, state_dim, action_dim = 2, 16, 8

    key = jax.random.PRNGKey(0)
    k_params, k_state, k_action = jax.random.split(key, 3)

    raw = init_raw_params(k_params, state_dim, action_dim)
    params = pack_params(raw, state_dim, action_dim)

    state = jax.random.normal(k_state, (batch, state_dim), jnp.float32)
    action = jax.random.normal(k_action, (batch, action_dim), jnp.float32)

    q1, q2 = jax.block_until_ready(critic_forward(state, action, params))
    r1, r2 = critic_reference(state, action, raw)

    assert q1.shape == (batch, 1) and q2.shape == (batch, 1)
    assert jnp.allclose(q1, r1, atol=1e-2, rtol=1e-2)
    assert jnp.allclose(q2, r2, atol=1e-2, rtol=1e-2)

    print("KERNEL_OK")
</pallas_src>

<mosaic_0001>
module attributes {stable_mosaic.version = 11 : i64} {
  func.func @critic_kernel(%arg0: i32, %arg1: memref<2x16xf32, #tpu.memory_space<vmem>>, %arg2: memref<2x8xf32, #tpu.memory_space<vmem>>, %arg3: memref<16x1024xbf16, #tpu.memory_space<vmem>>, %arg4: memref<8x1024xbf16, #tpu.memory_space<vmem>>, %arg5: memref<1x1024xf32, #tpu.memory_space<vmem>>, %arg6: memref<2x512x512xbf16, #tpu.memory_space<vmem>>, %arg7: memref<1x1024xf32, #tpu.memory_space<vmem>>, %arg8: memref<2x512xf32, #tpu.memory_space<vmem>>, %arg9: memref<1x2xf32, #tpu.memory_space<vmem>>, %arg10: memref<2x2xf32, #tpu.memory_space<vmem>>) attributes {dimension_semantics = [#tpu.dimension_semantics<parallel>], iteration_bounds = array<i64: 1>, scalar_prefetch = 0 : i64, scratch_operands = 0 : i64, tpu.core_type = #tpu.core_type<tc>, window_params = [{transform_indices = @transform_0, window_bounds = array<i64: 2, 16>}, {transform_indices = @transform_1, window_bounds = array<i64: 2, 8>}, {pipeline_mode = #tpu.pipeline_mode<synchronous>, transform_indices = @transform_2, window_bounds = array<i64: 16, 1024>}, {pipeline_mode = #tpu.pipeline_mode<synchronous>, transform_indices = @transform_3, window_bounds = array<i64: 8, 1024>}, {pipeline_mode = #tpu.pipeline_mode<synchronous>, transform_indices = @transform_4, window_bounds = array<i64: 1, 1024>}, {pipeline_mode = #tpu.pipeline_mode<synchronous>, transform_indices = @transform_5, window_bounds = array<i64: 2, 512, 512>}, {pipeline_mode = #tpu.pipeline_mode<synchronous>, transform_indices = @transform_6, window_bounds = array<i64: 1, 1024>}, {pipeline_mode = #tpu.pipeline_mode<synchronous>, transform_indices = @transform_7, window_bounds = array<i64: 2, 512>}, {pipeline_mode = #tpu.pipeline_mode<synchronous>, transform_indices = @transform_8, window_bounds = array<i64: 1, 2>}, {transform_indices = @transform_9, window_bounds = array<i64: 2, 2>}]} {
    %c0 = arith.constant 0 : index
    %c0_0 = arith.constant 0 : index
    %0 = vector.load %arg1[%c0, %c0_0] : memref<2x16xf32, #tpu.memory_space<vmem>>, vector<2x16xf32>
    %1 = arith.truncf %0 : vector<2x16xf32> to vector<2x16xbf16>
    %c0_1 = arith.constant 0 : index
    %c0_2 = arith.constant 0 : index
    %2 = vector.load %arg2[%c0_1, %c0_2] : memref<2x8xf32, #tpu.memory_space<vmem>>, vector<2x8xf32>
    %3 = arith.truncf %2 : vector<2x8xf32> to vector<2x8xbf16>
    %c0_3 = arith.constant 0 : index
    %c0_4 = arith.constant 0 : index
    %4 = vector.load %arg3[%c0_3, %c0_4] : memref<16x1024xbf16, #tpu.memory_space<vmem>>, vector<16x1024xbf16>
    %cst = arith.constant dense<0.000000e+00> : vector<2x1024xf32>
    %5 = tpu.matmul %1, %4, %cst {dimension_numbers = #tpu.dot_dimension_numbers<[1], [0], [0], [1], [0, 0, 1, 1], [], []>} : vector<2x16xbf16>, vector<16x1024xbf16>, vector<2x1024xf32> -> vector<2x1024xf32>
    %c0_5 = arith.constant 0 : index
    %c0_6 = arith.constant 0 : index
    %6 = vector.load %arg4[%c0_5, %c0_6] : memref<8x1024xbf16, #tpu.memory_space<vmem>>, vector<8x1024xbf16>
    %cst_7 = arith.constant dense<0.000000e+00> : vector<2x1024xf32>
    %7 = tpu.matmul %3, %6, %cst_7 {dimension_numbers = #tpu.dot_dimension_numbers<[1], [0], [0], [1], [0, 0, 1, 1], [], []>} : vector<2x8xbf16>, vector<8x1024xbf16>, vector<2x1024xf32> -> vector<2x1024xf32>
    %8 = arith.addf %5, %7 : vector<2x1024xf32>
    %c0_8 = arith.constant 0 : index
    %c0_9 = arith.constant 0 : index
    %9 = vector.load %arg5[%c0_8, %c0_9] : memref<1x1024xf32, #tpu.memory_space<vmem>>, vector<1x1024xf32>
    %10 = vector.broadcast %9 : vector<1x1024xf32> to vector<2x1024xf32>
    %11 = arith.addf %8, %10 : vector<2x1024xf32>
    %cst_10 = arith.constant 0.000000e+00 : f32
    %12 = vector.broadcast %cst_10 : f32 to vector<2x1024xf32>
    %13 = arith.maximumf %11, %12 : vector<2x1024xf32>
    %14 = vector.extract_strided_slice %13 {offsets = [0, 0], sizes = [2, 512], strides = [1, 1]} : vector<2x1024xf32> to vector<2x512xf32>
    %15 = vector.extract_strided_slice %13 {offsets = [0, 512], sizes = [2, 512], strides = [1, 1]} : vector<2x1024xf32> to vector<2x512xf32>
    %16 = arith.truncf %14 : vector<2x512xf32> to vector<2x512xbf16>
    %c0_11 = arith.constant 0 : index
    %c0_12 = arith.constant 0 : index
    %c0_13 = arith.constant 0 : index
    %17 = vector.load %arg6[%c0_11, %c0_12, %c0_13] : memref<2x512x512xbf16, #tpu.memory_space<vmem>>, vector<1x512x512xbf16>
    %18 = vector.shape_cast %17 : vector<1x512x512xbf16> to vector<512x512xbf16>
    %cst_14 = arith.constant dense<0.000000e+00> : vector<2x512xf32>
    %19 = tpu.matmul %16, %18, %cst_14 {dimension_numbers = #tpu.dot_dimension_numbers<[1], [0], [0], [1], [0, 0, 1, 1], [], []>} : vector<2x512xbf16>, vector<512x512xbf16>, vector<2x512xf32> -> vector<2x512xf32>
    %c0_15 = arith.constant 0 : index
    %c0_16 = arith.constant 0 : index
    %20 = vector.load %arg7[%c0_15, %c0_16] : memref<1x1024xf32, #tpu.memory_space<vmem>>, vector<1x512xf32>
    %21 = vector.broadcast %20 : vector<1x512xf32> to vector<2x512xf32>
    %22 = arith.addf %19, %21 : vector<2x512xf32>
    %23 = arith.truncf %15 : vector<2x512xf32> to vector<2x512xbf16>
    %c1 = arith.constant 1 : index
    %c0_17 = arith.constant 0 : index
    %c0_18 = arith.constant 0 : index
    %24 = vector.load %arg6[%c1, %c0_17, %c0_18] : memref<2x512x512xbf16, #tpu.memory_space<vmem>>, vector<1x512x512xbf16>
    %25 = vector.shape_cast %24 : vector<1x512x512xbf16> to vector<512x512xbf16>
    %cst_19 = arith.constant dense<0.000000e+00> : vector<2x512xf32>
    %26 = tpu.matmul %23, %25, %cst_19 {dimension_numbers = #tpu.dot_dimension_numbers<[1], [0], [0], [1], [0, 0, 1, 1], [], []>} : vector<2x512xbf16>, vector<512x512xbf16>, vector<2x512xf32> -> vector<2x512xf32>
    %c0_20 = arith.constant 0 : index
    %c512 = arith.constant 512 : index
    %27 = vector.load %arg7[%c0_20, %c512] : memref<1x1024xf32, #tpu.memory_space<vmem>>, vector<1x512xf32>
    %28 = vector.broadcast %27 : vector<1x512xf32> to vector<2x512xf32>
    %29 = arith.addf %26, %28 : vector<2x512xf32>
    %cst_21 = arith.constant 0.000000e+00 : f32
    %30 = vector.broadcast %cst_21 : f32 to vector<2x512xf32>
    %31 = arith.maximumf %22, %30 : vector<2x512xf32>
    %cst_22 = arith.constant 0.000000e+00 : f32
    %32 = vector.broadcast %cst_22 : f32 to vector<2x512xf32>
    %33 = arith.maximumf %29, %32 : vector<2x512xf32>
    %c0_23 = arith.constant 0 : index
    %c0_24 = arith.constant 0 : index
    %34 = vector.load %arg8[%c0_23, %c0_24] : memref<2x512xf32, #tpu.memory_space<vmem>>, vector<1x512xf32>
    %35 = vector.broadcast %34 : vector<1x512xf32> to vector<2x512xf32>
    %36 = arith.mulf %31, %35 : vector<2x512xf32>
    %cst_25 = arith.constant dense<0.000000e+00> : vector<2xf32>
    %37 = vector.multi_reduction <add>, %36, %cst_25 [1] : vector<2x512xf32> to vector<2xf32>
    %38 = vector.shape_cast %37 : vector<2xf32> to vector<2x1xf32>
    %c1_26 = arith.constant 1 : index
    %c0_27 = arith.constant 0 : index
    %39 = vector.load %arg8[%c1_26, %c0_27] : memref<2x512xf32, #tpu.memory_space<vmem>>, vector<1x512xf32>
    %40 = vector.broadcast %39 : vector<1x512xf32> to vector<2x512xf32>
    %41 = arith.mulf %33, %40 : vector<2x512xf32>
    %cst_28 = arith.constant dense<0.000000e+00> : vector<2xf32>
    %42 = vector.multi_reduction <add>, %41, %cst_28 [1] : vector<2x512xf32> to vector<2xf32>
    %43 = vector.shape_cast %42 : vector<2xf32> to vector<2x1xf32>
    %44 = tpu.concatenate %38, %43 in 1 : vector<2x1xf32>, vector<2x1xf32> -> vector<2x2xf32>
    %c0_29 = arith.constant 0 : index
    %c0_30 = arith.constant 0 : index
    %45 = vector.load %arg9[%c0_29, %c0_30] : memref<1x2xf32, #tpu.memory_space<vmem>>, vector<1x2xf32>
    %46 = vector.broadcast %45 : vector<1x2xf32> to vector<2x2xf32>
    %47 = arith.addf %44, %46 : vector<2x2xf32>
    %c0_31 = arith.constant 0 : index
    %c0_32 = arith.constant 0 : index
    %48 = vector.load %arg10[%c0_31, %c0_32] : memref<2x2xf32, #tpu.memory_space<vmem>>, vector<2x2xf32>
    tpu.vector_store %arg10[%c0_31, %c0_32], %47 {strides = array<i32>} : memref<2x2xf32, #tpu.memory_space<vmem>>, vector<2x2xf32>,
    return
  }
  func.func @transform_0(%arg0: i32) -> (i32, i32) {
    %c0_i32 = arith.constant 0 : i32
    %c0_i32_0 = arith.constant 0 : i32
    return %arg0, %c0_i32 : i32, i32
  }
  func.func @transform_1(%arg0: i32) -> (i32, i32) {
    %c0_i32 = arith.constant 0 : i32
    %c0_i32_0 = arith.constant 0 : i32
    return %arg0, %c0_i32 : i32, i32
  }
  func.func @transform_2(%arg0: i32) -> (i32, i32) {
    %c0_i32 = arith.constant 0 : i32
    %c0_i32_0 = arith.constant 0 : i32
    %c0_i32_1 = arith.constant 0 : i32
    return %c0_i32, %c0_i32_0 : i32, i32
  }
  func.func @transform_3(%arg0: i32) -> (i32, i32) {
    %c0_i32 = arith.constant 0 : i32
    %c0_i32_0 = arith.constant 0 : i32
    %c0_i32_1 = arith.constant 0 : i32
    return %c0_i32, %c0_i32_0 : i32, i32
  }
  func.func @transform_4(%arg0: i32) -> (i32, i32) {
    %c0_i32 = arith.constant 0 : i32
    %c0_i32_0 = arith.constant 0 : i32
    %c0_i32_1 = arith.constant 0 : i32
    return %c0_i32, %c0_i32_0 : i32, i32
  }
  func.func @transform_5(%arg0: i32) -> (i32, i32, i32) {
    %c0_i32 = arith.constant 0 : i32
    %c0_i32_0 = arith.constant 0 : i32
    %c0_i32_1 = arith.constant 0 : i32
    %c0_i32_2 = arith.constant 0 : i32
    return %c0_i32, %c0_i32_0, %c0_i32_1 : i32, i32, i32
  }
  func.func @transform_6(%arg0: i32) -> (i32, i32) {
    %c0_i32 = arith.constant 0 : i32
    %c0_i32_0 = arith.constant 0 : i32
    %c0_i32_1 = arith.constant 0 : i32
    return %c0_i32, %c0_i32_0 : i32, i32
  }
  func.func @transform_7(%arg0: i32) -> (i32, i32) {
    %c0_i32 = arith.constant 0 : i32
    %c0_i32_0 = arith.constant 0 : i32
    %c0_i32_1 = arith.constant 0 : i32
    return %c0_i32, %c0_i32_0 : i32, i32
  }
  func.func @transform_8(%arg0: i32) -> (i32, i32) {
    %c0_i32 = arith.constant 0 : i32
    %c0_i32_0 = arith.constant 0 : i32
    %c0_i32_1 = arith.constant 0 : i32
    return %c0_i32, %c0_i32_0 : i32, i32
  }
  func.func @transform_9(%arg0: i32) -> (i32, i32) {
    %c0_i32 = arith.constant 0 : i32
    %c0_i32_0 = arith.constant 0 : i32
    return %arg0, %c0_i32 : i32, i32
  }
}

</mosaic_0001>

<llo_original>
// kernel: tpu_custom_call.1
$region0: #{tpu_custom_call.1}
  #allocation0 [shape = 'u32[]', space=smem, size = 0x4, offset = 0x4, fixed_abs, tag = 'smem constant byte address 0x4 - core index']
  #allocation1 [shape = 'u32[72,128]{1,0:T(1,128)}', space=vmem, size = 0x9000, scoped, tag = 'internal scratch']
  %s0 = inlined_call_operand.hbm [shape: f32[2,16], index: 0, kind: input, shape index: {}]
  %s1 = inlined_call_operand.hbm [shape: f32[2,8], index: 1, kind: input, shape index: {}]
  %s2 = inlined_call_operand.hbm [shape: bf16[16,1024], index: 2, kind: input, shape index: {}]
  %s3 = inlined_call_operand.hbm [shape: bf16[8,1024], index: 3, kind: input, shape index: {}]
  %s4 = inlined_call_operand.hbm [shape: f32[1,1024], index: 4, kind: input, shape index: {}]
  %s5 = inlined_call_operand.hbm [shape: bf16[2,512,512], index: 5, kind: input, shape index: {}]
  %s6 = inlined_call_operand.hbm [shape: f32[1,1024], index: 6, kind: input, shape index: {}]
  %s7 = inlined_call_operand.hbm [shape: f32[2,512], index: 7, kind: input, shape index: {}]
  %s8 = inlined_call_operand.vmem [shape: f32[1,2], index: 8, kind: input, shape index: {}]
  %s9 = inlined_call_operand.hbm [shape: f32[2,2], index: 9, kind: output, shape index: {}]
  %s10 = sld [smem:[#allocation0]]
  $region78: #{tpu_custom_call.1} parent=0
    _
  %s12 = ssub.s32 1, %s10
  %s13 = scalar_select 0, %s12, %s10
  $region1: #{tpu_custom_call.1} parent=0
    #allocation2 [shape = 'u8[1024]{0}', space=vmem, size = 0x400, scoped, tag = 'input window, operand 0, single buffered']
    #allocation3 [shape = 's32[1]{0}', space=sflag, size = 0x4, scoped, tag = 'scoped memory for tpu_custom_call.1']
    #allocation4 [shape = 's32[1]{0}', space=sflag, size = 0x4, scoped, tag = 'scoped memory for tpu_custom_call.1']
    #allocation5 [shape = 'u8[1024]{0}', space=vmem, size = 0x400, scoped, tag = 'input window, operand 1, single buffered']
    #allocation6 [shape = 's32[1]{0}', space=sflag, size = 0x4, scoped, tag = 'scoped memory for tpu_custom_call.1']
    #allocation7 [shape = 'u8[32768]{0}', space=vmem, size = 0x8000, scoped, tag = 'input window, operand 2, single buffered']
    #allocation8 [shape = 'u8[16384]{0}', space=vmem, size = 0x4000, scoped, tag = 'input window, operand 3, single buffered']
    #allocation9 [shape = 's32[1]{0}', space=sflag, size = 0x4, scoped, tag = 'scoped memory for tpu_custom_call.1']
    #allocation10 [shape = 'u8[4096]{0}', space=vmem, size = 0x1000, scoped, tag = 'input window, operand 4, single buffered']
    #allocation11 [shape = 'u8[1048576]{0}', space=vmem, size = 0x100000, scoped, tag = 'input window, operand 5, single buffered']
    #allocation12 [shape = 's32[1]{0}', space=sflag, size = 0x4, scoped, tag = 'scoped memory for tpu_custom_call.1']
    #allocation13 [shape = 'u8[4096]{0}', space=vmem, size = 0x1000, scoped, tag = 'input window, operand 6, single buffered']
    #allocation14 [shape = 'u8[4096]{0}', space=vmem, size = 0x1000, scoped, tag = 'input window, operand 7, single buffered']
    #allocation15 [shape = 's32[1]{0}', space=sflag, size = 0x4, scoped, tag = 'scoped memory for tpu_custom_call.1']
    #allocation16 [shape = 'u8[1024]{0}', space=vmem, size = 0x400, scoped, tag = 'output window, operand 0, single buffered']
    %14 = vsyncpa [#allocation3], 0
    %15 = vsyncpa [#allocation6], 0
    %16 = vsyncpa [#allocation9], 0
    %17 = vsyncpa [#allocation12], 0
    %18 = vsyncpa [#allocation15], 0
    %19 = vsyncpa [#allocation4], 0
    // Predicated region
    $region2: #{tpu_custom_call.1} parent=1 // pred_check
      _
    $region3: #{tpu_custom_call.1} parent=1 // pred_check_branch
      %21 = sbr.rel (0) target = $region5
    $region4: #{tpu_custom_call.1} parent=1 // pred_region
      %23 = vsyncadd [#allocation3], 0
      %s25 = sshll.u32 %s0, 4
      %s26 = int_to_ptr.hbm [resolvable:$true] %s25
      %s27 = sshll.u32 [#allocation2], 4
      %s28 = int_to_ptr.vmem [resolvable:$true] %s27
      %30 = dma.hbm_to_vmem [thread:$0]  %s26, 32, %s28, [#allocation3]
    $region5: #{tpu_custom_call.1} parent=1 // pred_fallthru
      _
    // Predicated region
    $region6: #{tpu_custom_call.1} parent=1 // pred_check
      _
    $region7: #{tpu_custom_call.1} parent=1 // pred_check_branch
      %32 = sbr.rel (0) target = $region9
    $region8: #{tpu_custom_call.1} parent=1 // pred_region
      %34 = vsyncadd [#allocation6], 0
      %s36 = sshll.u32 %s1, 4
      %s37 = int_to_ptr.hbm [resolvable:$true] %s36
      %s38 = sshll.u32 [#allocation5], 4
      %s39 = int_to_ptr.vmem [resolvable:$true] %s38
      %41 = dma.hbm_to_vmem [thread:$0]  %s37, 32, %s39, [#allocation6]
    $region9: #{tpu_custom_call.1} parent=1 // pred_fallthru
      _
    // Predicated region
    $region10: #{tpu_custom_call.1} parent=1 // pred_check
      _
    $region11: #{tpu_custom_call.1} parent=1 // pred_check_branch
      %43 = sbr.rel (0) target = $region13
    $region12: #{tpu_custom_call.1} parent=1 // pred_region
      %45 = vsyncadd [#allocation6], 0
      %s46 = sshll.u32 %s2, 4
      %s47 = int_to_ptr.hbm [resolvable:$true] %s46
      %s48 = sshll.u32 [#allocation7], 4
      %s49 = int_to_ptr.vmem [resolvable:$true] %s48
      %54 = dma.hbm_to_vmem [thread:$0]  %s47, 1024, %s49, [#allocation6], 512, 512, 32
    $region13: #{tpu_custom_call.1} parent=1 // pred_fallthru
      _
    // Predicated region
    $region14: #{tpu_custom_call.1} parent=1 // pred_check
      _
    $region15: #{tpu_custom_call.1} parent=1 // pred_check_branch
      %56 = sbr.rel (0) target = $region17
    $region16: #{tpu_custom_call.1} parent=1 // pred_region
      %58 = vsyncadd [#allocation9], 0
      %s60 = sshll.u32 %s3, 4
      %s61 = int_to_ptr.hbm [resolvable:$true] %s60
      %s62 = sshll.u32 [#allocation8], 4
      %s63 = int_to_ptr.vmem [resolvable:$true] %s62
      %65 = dma.hbm_to_vmem [thread:$0]  %s61, 512, %s63, [#allocation9]
    $region17: #{tpu_custom_call.1} parent=1 // pred_fallthru
      _
    // Predicated region
    $region18: #{tpu_custom_call.1} parent=1 // pred_check
      _
    $region19: #{tpu_custom_call.1} parent=1 // pred_check_branch
      %67 = sbr.rel (0) target = $region21
    $region20: #{tpu_custom_call.1} parent=1 // pred_region
      %69 = vsyncadd [#allocation9], 0
      %s71 = sshll.u32 %s4, 4
      %s72 = int_to_ptr.hbm [resolvable:$true] %s71
      %s73 = sshll.u32 [#allocation10], 4
      %s74 = int_to_ptr.vmem [resolvable:$true] %s73
      %76 = dma.hbm_to_vmem [thread:$0]  %s72, 128, %s74, [#allocation9]
    $region21: #{tpu_custom_call.1} parent=1 // pred_fallthru
      _
    // Predicated region
    $region22: #{tpu_custom_call.1} parent=1 // pred_check
      _
    $region23: #{tpu_custom_call.1} parent=1 // pred_check_branch
      %78 = sbr.rel (0) target = $region25
    $region24: #{tpu_custom_call.1} parent=1 // pred_region
      %80 = vsyncadd [#allocation12], 0
      %s81 = sshll.u32 %s5, 4
      %s82 = int_to_ptr.hbm [resolvable:$true] %s81
      %s83 = sshll.u32 [#allocation11], 4
      %s84 = int_to_ptr.vmem [resolvable:$true] %s83
      %89 = dma.hbm_to_vmem [thread:$0]  %s82, 32768, %s84, [#allocation12], 256, 256, 16
    $region25: #{tpu_custom_call.1} parent=1 // pred_fallthru
      _
    // Predicated region
    $region26: #{tpu_custom_call.1} parent=1 // pred_check
      _
    $region27: #{tpu_custom_call.1} parent=1 // pred_check_branch
      %91 = sbr.rel (0) target = $region29
    $region28: #{tpu_custom_call.1} parent=1 // pred_region
      %93 = vsyncadd [#allocation12], 0
      %s95 = sshll.u32 %s6, 4
      %s96 = int_to_ptr.hbm [resolvable:$true] %s95
      %s97 = sshll.u32 [#allocation13], 4
      %s98 = int_to_ptr.vmem [resolvable:$true] %s97
      %100 = dma.hbm_to_vmem [thread:$0]  %s96, 128, %s98, [#allocation12]
    $region29: #{tpu_custom_call.1} parent=1 // pred_fallthru
      _
    // Predicated region
    $region30: #{tpu_custom_call.1} parent=1 // pred_check
      _
    $region31: #{tpu_custom_call.1} parent=1 // pred_check_branch
      %102 = sbr.rel (0) target = $region33
    $region32: #{tpu_custom_call.1} parent=1 // pred_region
      %104 = vsyncadd [#allocation15], 0
      %s106 = sshll.u32 %s7, 4
      %s107 = int_to_ptr.hbm [resolvable:$true] %s106
      %s108 = sshll.u32 [#allocation14], 4
      %s109 = int_to_ptr.vmem [resolvable:$true] %s108
      %111 = dma.hbm_to_vmem [thread:$0]  %s107, 128, %s109, [#allocation15]
    $region33: #{tpu_custom_call.1} parent=1 // pred_fallthru
      _
    // Predicated region
    $region34: #{tpu_custom_call.1} parent=1 // pred_check
      _
    $region35: #{tpu_custom_call.1} parent=1 // pred_check_branch
      %113 = sbr.rel (0) target = $region37
    $region36: #{tpu_custom_call.1} parent=1 // pred_region
      _
    $region37: #{tpu_custom_call.1} parent=1 // pred_fallthru
      _
    // Predicated region
    $region38: #{tpu_custom_call.1} parent=1 // pred_check
      _
    $region39: #{tpu_custom_call.1} parent=1 // pred_check_branch
      %115 = sbr.rel (0) target = $region41
    $region40: #{tpu_custom_call.1} parent=1 // pred_region
      %117 = dma.done [#allocation3], 32
    $region41: #{tpu_custom_call.1} parent=1 // pred_fallthru
      _
    // Predicated region
    $region42: #{tpu_custom_call.1} parent=1 // pred_check
      _
    $region43: #{tpu_custom_call.1} parent=1 // pred_check_branch
      %119 = sbr.rel (0) target = $region45
    $region44: #{tpu_custom_call.1} parent=1 // pred_region
      %121 = dma.done [#allocation6], 32
    $region45: #{tpu_custom_call.1} parent=1 // pred_fallthru
      _
    // Predicated region
    $region46: #{tpu_custom_call.1} parent=1 // pred_check
      _
    $region47: #{tpu_custom_call.1} parent=1 // pred_check_branch
      %123 = sbr.rel (0) target = $region49
    $region48: #{tpu_custom_call.1} parent=1 // pred_region
      %125 = dma.done [#allocation6], 1024
    $region49: #{tpu_custom_call.1} parent=1 // pred_fallthru
      _
    // Predicated region
    $region50: #{tpu_custom_call.1} parent=1 // pred_check
      _
    $region51: #{tpu_custom_call.1} parent=1 // pred_check_branch
      %127 = sbr.rel (0) target = $region53
    $region52: #{tpu_custom_call.1} parent=1 // pred_region
      %129 = dma.done [#allocation9], 512
    $region53: #{tpu_custom_call.1} parent=1 // pred_fallthru
      _
    // Predicated region
    $region54: #{tpu_custom_call.1} parent=1 // pred_check
      _
    $region55: #{tpu_custom_call.1} parent=1 // pred_check_branch
      %131 = sbr.rel (0) target = $region57
    $region56: #{tpu_custom_call.1} parent=1 // pred_region
      %133 = dma.done [#allocation9], 128
    $region57: #{tpu_custom_call.1} parent=1 // pred_fallthru
      _
    // Predicated region
    $region58: #{tpu_custom_call.1} parent=1 // pred_check
      _
    $region59: #{tpu_custom_call.1} parent=1 // pred_check_branch
      %135 = sbr.rel (0) target = $region61
    $region60: #{tpu_custom_call.1} parent=1 // pred_region
      %137 = dma.done [#allocation12], 32768
    $region61: #{tpu_custom_call.1} parent=1 // pred_fallthru
      _
    // Predicated region
    $region62: #{tpu_custom_call.1} parent=1 // pred_check
      _
    $region63: #{tpu_custom_call.1} parent=1 // pred_check_branch
      %139 = sbr.rel (0) target = $region65
    $region64: #{tpu_custom_call.1} parent=1 // pred_region
      %141 = dma.done [#allocation12], 128
    $region65: #{tpu_custom_call.1} parent=1 // pred_fallthru
      _
    // Predicated region
    $region66: #{tpu_custom_call.1} parent=1 // pred_check
      _
    $region67: #{tpu_custom_call.1} parent=1 // pred_check_branch
      %143 = sbr.rel (0) target = $region69
    $region68: #{tpu_custom_call.1} parent=1 // pred_region
      %145 = dma.done [#allocation15], 128
    $region69: #{tpu_custom_call.1} parent=1 // pred_fallthru
      _
    %v147 = vld [vmem:[#allocation2] sm:$0x3]
    %v148 = vpack.c.bf16 %v147, %v147
    %v149 = vld [vmem:[#allocation5] sm:$0x3]
    %v150 = vpack.c.bf16 %v149, %v149
    %v151 = vld [vmem:[#allocation7] sm:$0xff]
    %v152 = vld [vmem:[#allocation7 + $0x8] sm:$0xff]
    %v153 = vld [vmem:[#allocation7 + $0x10] sm:$0xff]
    %v154 = vld [vmem:[#allocation7 + $0x18] sm:$0xff]
    %v155 = vld [vmem:[#allocation7 + $0x20] sm:$0xff]
    %v156 = vld [vmem:[#allocation7 + $0x28] sm:$0xff]
    %v157 = vld [vmem:[#allocation7 + $0x30] sm:$0xff]
    %v158 = vld [vmem:[#allocation7 + $0x38] sm:$0xff]
    %v159 = vld [vmem:[#allocation8] sm:$0xff]
    %v160 = vld [vmem:[#allocation8 + $0x8] sm:$0xff]
    %v161 = vld [vmem:[#allocation8 + $0x10] sm:$0xff]
    %v162 = vld [vmem:[#allocation8 + $0x18] sm:$0xff]
    %v167 = vunpack.c.l.b16 %v159
    %v168 = vunpack.c.h.b16 %v159
    %v169 = vunpack.c.l.b16 %v160
    %v170 = vunpack.c.h.b16 %v160
    %v171 = vunpack.c.l.b16 %v161
    %v172 = vunpack.c.h.b16 %v161
    %v173 = vunpack.c.l.b16 %v162
    %v174 = vunpack.c.h.b16 %v162
    %v175 = vpack.c.b16 %v167, %v167
    %v176 = vpack.c.b16 %v168, %v168
    %v177 = vpack.c.b16 %v169, %v169
    %v178 = vpack.c.b16 %v170, %v170
    %v179 = vpack.c.b16 %v171, %v171
    %v180 = vpack.c.b16 %v172, %v172
    %v181 = vpack.c.b16 %v173, %v173
    %v182 = vpack.c.b16 %v174, %v174
    %vm183 = vcmask 64512
    %v185 = vsel %vm183, %v150, 0
    %vm187 = vcmask 1043456
    %v189 = vsel %vm187, %v175, 0
    %v192 = vsel %vm187, %v176, 0
    %v195 = vsel %vm187, %v177, 0
    %v198 = vsel %vm187, %v178, 0
    %v201 = vsel %vm187, %v179, 0
    %v204 = vsel %vm187, %v180, 0
    %v207 = vsel %vm187, %v181, 0
    %v210 = vsel %vm187, %v182, 0
    %212 = vmatpush.bf16.msra.mxu0 0
    %213 = vmatpush.bf16.msra.mxu0 0
    %214 = vmatpush.bf16.msra.mxu0 0
    %215 = vmatpush.bf16.msra.mxu0 0
    %216 = vmatpush.bf16.msra.mxu0 0
    %217 = vmatpush.bf16.msra.mxu0 0
    %218 = vmatpush.bf16.msra.mxu0 0
    %219 = vmatpush.bf16.msra.mxu0 %v189
    %220 = vmatmul.bf16.gmra.mxu0 %v185
    %v221 = vpop.f32.mrf.mxu0
    %v222 = vadd.f32 0.0, %v221
    %v223 = vpop.f32.mrf.mxu0
    %224 = vdwg.mxu0
    %225 = vmatpush.bf16.msra.mxu0 0
    %226 = vmatpush.bf16.msra.mxu0 0
    %227 = vmatpush.bf16.msra.mxu0 0
    %228 = vmatpush.bf16.msra.mxu0 0
    %229 = vmatpush.bf16.msra.mxu0 0
    %230 = vmatpush.bf16.msra.mxu0 0
    %231 = vmatpush.bf16.msra.mxu0 0
    %232 = vmatpush.bf16.msra.mxu0 %v192
    %233 = vmatmul.bf16.gmra.mxu0 %v185
    %v234 = vpop.f32.mrf.mxu0
    %v235 = vadd.f32 0.0, %v234
    %v236 = vpop.f32.mrf.mxu0
    %237 = vdwg.mxu0
    %238 = vmatpush.bf16.msra.mxu0 0
    %239 = vmatpush.bf16.msra.mxu0 0
    %240 = vmatpush.bf16.msra.mxu0 0
    %241 = vmatpush.bf16.msra.mxu0 0
    %242 = vmatpush.bf16.msra.mxu0 0
    %243 = vmatpush.bf16.msra.mxu0 0
    %244 = vmatpush.bf16.msra.mxu0 0
    %245 = vmatpush.bf16.msra.mxu0 %v195
    %246 = vmatmul.bf16.gmra.mxu0 %v185
    %v247 = vpop.f32.mrf.mxu0
    %v248 = vadd.f32 0.0, %v247
    %v249 = vpop.f32.mrf.mxu0
    %250 = vdwg.mxu0
    %251 = vmatpush.bf16.msra.mxu0 0
    %252 = vmatpush.bf16.msra.mxu0 0
    %253 = vmatpush.bf16.msra.mxu0 0
    %254 = vmatpush.bf16.msra.mxu0 0
    %255 = vmatpush.bf16.msra.mxu0 0
    %256 = vmatpush.bf16.msra.mxu0 0
    %257 = vmatpush.bf16.msra.mxu0 0
    %258 = vmatpush.bf16.msra.mxu0 %v198
    %259 = vmatmul.bf16.gmra.mxu0 %v185
    %v260 = vpop.f32.mrf.mxu0
    %v261 = vadd.f32 0.0, %v260
    %v262 = vpop.f32.mrf.mxu0
    %263 = vdwg.mxu0
    %264 = vmatpush.bf16.msra.mxu0 0
    %265 = vmatpush.bf16.msra.mxu0 0
    %266 = vmatpush.bf16.msra.mxu0 0
    %267 = vmatpush.bf16.msra.mxu0 0
    %268 = vmatpush.bf16.msra.mxu0 0
    %269 = vmatpush.bf16.msra.mxu0 0
    %270 = vmatpush.bf16.msra.mxu0 0
    %271 = vmatpush.bf16.msra.mxu0 %v201
    %272 = vmatmul.bf16.gmra.mxu0 %v185
    %v273 = vpop.f32.mrf.mxu0
    %v274 = vadd.f32 0.0, %v273
    %v275 = vpop.f32.mrf.mxu0
    %276 = vdwg.mxu0
    %277 = vmatpush.bf16.msra.mxu0 0
    %278 = vmatpush.bf16.msra.mxu0 0
    %279 = vmatpush.bf16.msra.mxu0 0
    %280 = vmatpush.bf16.msra.mxu0 0
    %281 = vmatpush.bf16.msra.mxu0 0
    %282 = vmatpush.bf16.msra.mxu0 0
    %283 = vmatpush.bf16.msra.mxu0 0
    %284 = vmatpush.bf16.msra.mxu0 %v204
    %285 = vmatmul.bf16.gmra.mxu0 %v185
    %v286 = vpop.f32.mrf.mxu0
    %v287 = vadd.f32 0.0, %v286
    %v288 = vpop.f32.mrf.mxu0
    %289 = vdwg.mxu0
    %290 = vmatpush.bf16.msra.mxu0 0
    %291 = vmatpush.bf16.msra.mxu0 0
    %292 = vmatpush.bf16.msra.mxu0 0
    %293 = vmatpush.bf16.msra.mxu0 0
    %294 = vmatpush.bf16.msra.mxu0 0
    %295 = vmatpush.bf16.msra.mxu0 0
    %296 = vmatpush.bf16.msra.mxu0 0
    %297 = vmatpush.bf16.msra.mxu0 %v207
    %298 = vmatmul.bf16.gmra.mxu0 %v185
    %v299 = vpop.f32.mrf.mxu0
    %v300 = vadd.f32 0.0, %v299
    %v301 = vpop.f32.mrf.mxu0
    %302 = vdwg.mxu0
    %303 = vmatpush.bf16.msra.mxu0 0
    %304 = vmatpush.bf16.msra.mxu0 0
    %305 = vmatpush.bf16.msra.mxu0 0
    %306 = vmatpush.bf16.msra.mxu0 0
    %307 = vmatpush.bf16.msra.mxu0 0
    %308 = vmatpush.bf16.msra.mxu0 0
    %309 = vmatpush.bf16.msra.mxu0 0
    %310 = vmatpush.bf16.msra.mxu0 %v210
    %311 = vmatmul.bf16.gmra.mxu0 %v185
    %v312 = vpop.f32.mrf.mxu0
    %v313 = vadd.f32 0.0, %v312
    %v314 = vpop.f32.mrf.mxu0
    %315 = vdwg.mxu0
    %v324 = vunpack.c.l.b16 %v151
    %v325 = vunpack.c.h.b16 %v151
    %v326 = vunpack.c.l.b16 %v152
    %v327 = vunpack.c.h.b16 %v152
    %v328 = vunpack.c.l.b16 %v153
    %v329 = vunpack.c.h.b16 %v153
    %v330 = vunpack.c.l.b16 %v154
    %v331 = vunpack.c.h.b16 %v154
    %v332 = vunpack.c.l.b16 %v155
    %v333 = vunpack.c.h.b16 %v155
    %v334 = vunpack.c.l.b16 %v156
    %v335 = vunpack.c.h.b16 %v156
    %v336 = vunpack.c.l.b16 %v157
    %v337 = vunpack.c.h.b16 %v157
    %v338 = vunpack.c.l.b16 %v158
    %v339 = vunpack.c.h.b16 %v158
    %v340 = vpack.c.b16 %v332, %v324
    %v341 = vpack.c.b16 %v333, %v325
    %v342 = vpack.c.b16 %v334, %v326
    %v343 = vpack.c.b16 %v335, %v327
    %v344 = vpack.c.b16 %v336, %v328
    %v345 = vpack.c.b16 %v337, %v329
    %v346 = vpack.c.b16 %v338, %v330
    %v347 = vpack.c.b16 %v339, %v331
    %vm356 = vcmask 130048
    %v358 = vsel %vm356, %v148, 0
    %360 = vmatpush.bf16.msra.mxu0 0
    %361 = vmatpush.bf16.msra.mxu0 0
    %362 = vmatpush.bf16.msra.mxu0 0
    %363 = vmatpush.bf16.msra.mxu0 0
    %364 = vmatpush.bf16.msra.mxu0 0
    %365 = vmatpush.bf16.msra.mxu0 0
    %366 = vmatpush.bf16.msra.mxu0 0
    %367 = vmatpush.bf16.msra.mxu0 %v340
    %368 = vmatmul.bf16.gmra.mxu0 %v358
    %v369 = vpop.f32.mrf.mxu0
    %v370 = vadd.f32 %v222, %v369
    %v371 = vpop.f32.mrf.mxu0
    %372 = vdwg.mxu0
    %373 = vmatpush.bf16.msra.mxu0 0
    %374 = vmatpush.bf16.msra.mxu0 0
    %375 = vmatpush.bf16.msra.mxu0 0
    %376 = vmatpush.bf16.msra.mxu0 0
    %377 = vmatpush.bf16.msra.mxu0 0
    %378 = vmatpush.bf16.msra.mxu0 0
    %379 = vmatpush.bf16.msra.mxu0 0
    %380 = vmatpush.bf16.msra.mxu0 %v341
    %381 = vmatmul.bf16.gmra.mxu0 %v358
    %v382 = vpop.f32.mrf.mxu0
    %v383 = vadd.f32 %v235, %v382
    %v384 = vpop.f32.mrf.mxu0
    %385 = vdwg.mxu0
    %386 = vmatpush.bf16.msra.mxu0 0
    %387 = vmatpush.bf16.msra.mxu0 0
    %388 = vmatpush.bf16.msra.mxu0 0
    %389 = vmatpush.bf16.msra.mxu0 0
    %390 = vmatpush.bf16.msra.mxu0 0
    %391 = vmatpush.bf16.msra.mxu0 0
    %392 = vmatpush.bf16.msra.mxu0 0
    %393 = vmatpush.bf16.msra.mxu0 %v342
    %394 = vmatmul.bf16.gmra.mxu0 %v358
    %v395 = vpop.f32.mrf.mxu0
    %v396 = vadd.f32 %v248, %v395
    %v397 = vpop.f32.mrf.mxu0
    %398 = vdwg.mxu0
    %399 = vmatpush.bf16.msra.mxu0 0
    %400 = vmatpush.bf16.msra.mxu0 0
    %401 = vmatpush.bf16.msra.mxu0 0
    %402 = vmatpush.bf16.msra.mxu0 0
    %403 = vmatpush.bf16.msra.mxu0 0
    %404 = vmatpush.bf16.msra.mxu0 0
    %405 = vmatpush.bf16.msra.mxu0 0
    %406 = vmatpush.bf16.msra.mxu0 %v343
    %407 = vmatmul.bf16.gmra.mxu0 %v358
    %v408 = vpop.f32.mrf.mxu0
    %v409 = vadd.f32 %v261, %v408
    %v410 = vpop.f32.mrf.mxu0
    %411 = vdwg.mxu0
    %412 = vmatpush.bf16.msra.mxu0 0
    %413 = vmatpush.bf16.msra.mxu0 0
    %414 = vmatpush.bf16.msra.mxu0 0
    %415 = vmatpush.bf16.msra.mxu0 0
    %416 = vmatpush.bf16.msra.mxu0 0
    %417 = vmatpush.bf16.msra.mxu0 0
    %418 = vmatpush.bf16.msra.mxu0 0
    %419 = vmatpush.bf16.msra.mxu0 %v344
    %420 = vmatmul.bf16.gmra.mxu0 %v358
    %v421 = vpop.f32.mrf.mxu0
    %v422 = vadd.f32 %v274, %v421
    %v423 = vpop.f32.mrf.mxu0
    %424 = vdwg.mxu0
    %425 = vmatpush.bf16.msra.mxu0 0
    %426 = vmatpush.bf16.msra.mxu0 0
    %427 = vmatpush.bf16.msra.mxu0 0
    %428 = vmatpush.bf16.msra.mxu0 0
    %429 = vmatpush.bf16.msra.mxu0 0
    %430 = vmatpush.bf16.msra.mxu0 0
    %431 = vmatpush.bf16.msra.mxu0 0
    %432 = vmatpush.bf16.msra.mxu0 %v345
    %433 = vmatmul.bf16.gmra.mxu0 %v358
    %v434 = vpop.f32.mrf.mxu0
    %v435 = vadd.f32 %v287, %v434
    %v436 = vpop.f32.mrf.mxu0
    %437 = vdwg.mxu0
    %438 = vmatpush.bf16.msra.mxu0 0
    %439 = vmatpush.bf16.msra.mxu0 0
    %440 = vmatpush.bf16.msra.mxu0 0
    %441 = vmatpush.bf16.msra.mxu0 0
    %442 = vmatpush.bf16.msra.mxu0 0
    %443 = vmatpush.bf16.msra.mxu0 0
    %444 = vmatpush.bf16.msra.mxu0 0
    %445 = vmatpush.bf16.msra.mxu0 %v346
    %446 = vmatmul.bf16.gmra.mxu0 %v358
    %v447 = vpop.f32.mrf.mxu0
    %v448 = vadd.f32 %v300, %v447
    %v449 = vpop.f32.mrf.mxu0
    %450 = vdwg.mxu0
    %451 = vmatpush.bf16.msra.mxu0 0
    %452 = vmatpush.bf16.msra.mxu0 0
    %453 = vmatpush.bf16.msra.mxu0 0
    %454 = vmatpush.bf16.msra.mxu0 0
    %455 = vmatpush.bf16.msra.mxu0 0
    %456 = vmatpush.bf16.msra.mxu0 0
    %457 = vmatpush.bf16.msra.mxu0 0
    %458 = vmatpush.bf16.msra.mxu0 %v347
    %459 = vmatmul.bf16.gmra.mxu0 %v358
    %v460 = vpop.f32.mrf.mxu0
    %v461 = vadd.f32 %v313, %v460
    %v462 = vpop.f32.mrf.mxu0
    %463 = vdwg.mxu0
    %v464 = vld [vmem:[#allocation10] sm:$0xff]
    %v466 = vperm.slane %v464, 0
    %v467 = vperm.slane %v464, 1
    %v468 = vperm.slane %v464, 2
    %v469 = vperm.slane %v464, 3
    %v470 = vperm.slane %v464, 4
    %v471 = vperm.slane %v464, 5
    %v472 = vperm.slane %v464, 6
    %v473 = vperm.slane %v464, 7
    %v482 = vadd.f32 %v370, %v466
    %v483 = vadd.f32 %v383, %v467
    %v484 = vadd.f32 %v396, %v468
    %v485 = vadd.f32 %v409, %v469
    %v486 = vadd.f32 %v422, %v470
    %v487 = vadd.f32 %v435, %v471
    %v488 = vadd.f32 %v448, %v472
    %v489 = vadd.f32 %v461, %v473
    %v490 = vmax.f32 %v482, 0.0
    %v491 = vmax.f32 %v483, 0.0
    %v492 = vmax.f32 %v484, 0.0
    %v493 = vmax.f32 %v485, 0.0
    %v494 = vmax.f32 %v486, 0.0
    %v495 = vmax.f32 %v487, 0.0
    %v496 = vmax.f32 %v488, 0.0
    %v497 = vmax.f32 %v489, 0.0
    %v498 = vpack.c.bf16 %v490, %v490
    %v499 = vpack.c.bf16 %v491, %v491
    %v500 = vpack.c.bf16 %v492, %v492
    %v501 = vpack.c.bf16 %v493, %v493
    %v502 = vld [vmem:[#allocation11] sm:$0xff]
    %v503 = vld [vmem:[#allocation11 + $0x8] sm:$0xff]
    %v504 = vld [vmem:[#allocation11 + $0x10] sm:$0xff]
    %v505 = vld [vmem:[#allocation11 + $0x18] sm:$0xff]
    %v506 = vld [vmem:[#allocation11 + $0x20] sm:$0xff]
    %v507 = vld [vmem:[#allocation11 + $0x28] sm:$0xff]
    %v508 = vld [vmem:[#allocation11 + $0x30] sm:$0xff]
    %v509 = vld [vmem:[#allocation11 + $0x38] sm:$0xff]
    %v510 = vld [vmem:[#allocation11 + $0x40] sm:$0xff]
    %v511 = vld [vmem:[#allocation11 + $0x48] sm:$0xff]
    %v512 = vld [vmem:[#allocation11 + $0x50] sm:$0xff]
    %v513 = vld [vmem:[#allocation11 + $0x58] sm:$0xff]
    %v514 = vld [vmem:[#allocation11 + $0x60] sm:$0xff]
    %v515 = vld [vmem:[#allocation11 + $0x68] sm:$0xff]
    %v516 = vld [vmem:[#allocation11 + $0x70] sm:$0xff]
    %v517 = vld [vmem:[#allocation11 + $0x78] sm:$0xff]
    %v518 = vld [vmem:[#allocation11 + $0x80] sm:$0xff]
    %v519 = vld [vmem:[#allocation11 + $0x88] sm:$0xff]
    %v520 = vld [vmem:[#allocation11 + $0x90] sm:$0xff]
    %v521 = vld [vmem:[#allocation11 + $0x98] sm:$0xff]
    %v522 = vld [vmem:[#allocation11 + $0xa0] sm:$0xff]
    %v523 = vld [vmem:[#allocation11 + $0xa8] sm:$0xff]
    %v524 = vld [vmem:[#allocation11 + $0xb0] sm:$0xff]
    %v525 = vld [vmem:[#allocation11 + $0xb8] sm:$0xff]
    %v526 = vld [vmem:[#allocation11 + $0xc0] sm:$0xff]
    %v527 = vld [vmem:[#allocation11 + $0xc8] sm:$0xff]
    %v528 = vld [vmem:[#allocation11 + $0xd0] sm:$0xff]
    %v529 = vld [vmem:[#allocation11 + $0xd8] sm:$0xff]
    %v530 = vld [vmem:[#allocation11 + $0xe0] sm:$0xff]
    %v531 = vld [vmem:[#allocation11 + $0xe8] sm:$0xff]
    %v532 = vld [vmem:[#allocation11 + $0xf0] sm:$0xff]
    %v533 = vld [vmem:[#allocation11 + $0xf8] sm:$0xff]
    %v534 = vld [vmem:[#allocation11 + $0x100] sm:$0xff]
    %v535 = vld [vmem:[#allocation11 + $0x108] sm:$0xff]
    %v536 = vld [vmem:[#allocation11 + $0x110] sm:$0xff]
    %v537 = vld [vmem:[#allocation11 + $0x118] sm:$0xff]
    %v538 = vld [vmem:[#allocation11 + $0x120] sm:$0xff]
    %v539 = vld [vmem:[#allocation11 + $0x128] sm:$0xff]
    %v540 = vld [vmem:[#allocation11 + $0x130] sm:$0xff]
    %v541 = vld [vmem:[#allocation11 + $0x138] sm:$0xff]
    %v542 = vld [vmem:[#allocation11 + $0x140] sm:$0xff]
    %v543 = vld [vmem:[#allocation11 + $0x148] sm:$0xff]
    %v544 = vld [vmem:[#allocation11 + $0x150] sm:$0xff]
    %v545 = vld [vmem:[#allocation11 + $0x158] sm:$0xff]
    %v546 = vld [vmem:[#allocation11 + $0x160] sm:$0xff]
    %v547 = vld [vmem:[#allocation11 + $0x168] sm:$0xff]
    %v548 = vld [vmem:[#allocation11 + $0x170] sm:$0xff]
    %v549 = vld [vmem:[#allocation11 + $0x178] sm:$0xff]
    %v550 = vld [vmem:[#allocation11 + $0x180] sm:$0xff]
    %v551 = vld [vmem:[#allocation11 + $0x188] sm:$0xff]
    %v552 = vld [vmem:[#allocation11 + $0x190] sm:$0xff]
    %v553 = vld [vmem:[#allocation11 + $0x198] sm:$0xff]
    %v554 = vld [vmem:[#allocation11 + $0x1a0] sm:$0xff]
    %v555 = vld [vmem:[#allocation11 + $0x1a8] sm:$0xff]
    %v556 = vld [vmem:[#allocation11 + $0x1b0] sm:$0xff]
    %v557 = vld [vmem:[#allocation11 + $0x1b8] sm:$0xff]
    %v558 = vld [vmem:[#allocation11 + $0x1c0] sm:$0xff]
    %v559 = vld [vmem:[#allocation11 + $0x1c8] sm:$0xff]
    %v560 = vld [vmem:[#allocation11 + $0x1d0] sm:$0xff]
    %v561 = vld [vmem:[#allocation11 + $0x1d8] sm:$0xff]
    %v562 = vld [vmem:[#allocation11 + $0x1e0] sm:$0xff]
    %v563 = vld [vmem:[#allocation11 + $0x1e8] sm:$0xff]
    %v564 = vld [vmem:[#allocation11 + $0x1f0] sm:$0xff]
    %v565 = vld [vmem:[#allocation11 + $0x1f8] sm:$0xff]
    %v566 = vld [vmem:[#allocation11 + $0x200] sm:$0xff]
    %v567 = vld [vmem:[#allocation11 + $0x208] sm:$0xff]
    %v568 = vld [vmem:[#allocation11 + $0x210] sm:$0xff]
    %v569 = vld [vmem:[#allocation11 + $0x218] sm:$0xff]
    %v570 = vld [vmem:[#allocation11 + $0x220] sm:$0xff]
    %v571 = vld [vmem:[#allocation11 + $0x228] sm:$0xff]
    %v572 = vld [vmem:[#allocation11 + $0x230] sm:$0xff]
    %v573 = vld [vmem:[#allocation11 + $0x238] sm:$0xff]
    %v574 = vld [vmem:[#allocation11 + $0x240] sm:$0xff]
    %v575 = vld [vmem:[#allocation11 + $0x248] sm:$0xff]
    %v576 = vld [vmem:[#allocation11 + $0x250] sm:$0xff]
    %v577 = vld [vmem:[#allocation11 + $0x258] sm:$0xff]
    %v578 = vld [vmem:[#allocation11 + $0x260] sm:$0xff]
    %v579 = vld [vmem:[#allocation11 + $0x268] sm:$0xff]
    %v580 = vld [vmem:[#allocation11 + $0x270] sm:$0xff]
    %v581 = vld [vmem:[#allocation11 + $0x278] sm:$0xff]
    %v582 = vld [vmem:[#allocation11 + $0x280] sm:$0xff]
    %v583 = vld [vmem:[#allocation11 + $0x288] sm:$0xff]
    %v584 = vld [vmem:[#allocation11 + $0x290] sm:$0xff]
    %v585 = vld [vmem:[#allocation11 + $0x298] sm:$0xff]
    %v586 = vld [vmem:[#allocation11 + $0x2a0] sm:$0xff]
    %v587 = vld [vmem:[#allocation11 + $0x2a8] sm:$0xff]
    %v588 = vld [vmem:[#allocation11 + $0x2b0] sm:$0xff]
    %v589 = vld [vmem:[#allocation11 + $0x2b8] sm:$0xff]
    %v590 = vld [vmem:[#allocation11 + $0x2c0] sm:$0xff]
    %v591 = vld [vmem:[#allocation11 + $0x2c8] sm:$0xff]
    %v592 = vld [vmem:[#allocation11 + $0x2d0] sm:$0xff]
    %v593 = vld [vmem:[#allocation11 + $0x2d8] sm:$0xff]
    %v594 = vld [vmem:[#allocation11 + $0x2e0] sm:$0xff]
    %v595 = vld [vmem:[#allocation11 + $0x2e8] sm:$0xff]
    %v596 = vld [vmem:[#allocation11 + $0x2f0] sm:$0xff]
    %v597 = vld [vmem:[#allocation11 + $0x2f8] sm:$0xff]
    %v598 = vld [vmem:[#allocation11 + $0x300] sm:$0xff]
    %v599 = vld [vmem:[#allocation11 + $0x308] sm:$0xff]
    %v600 = vld [vmem:[#allocation11 + $0x310] sm:$0xff]
    %v601 = vld [vmem:[#allocation11 + $0x318] sm:$0xff]
    %v602 = vld [vmem:[#allocation11 + $0x320] sm:$0xff]
    %v603 = vld [vmem:[#allocation11 + $0x328] sm:$0xff]
    %v604 = vld [vmem:[#allocation11 + $0x330] sm:$0xff]
    %v605 = vld [vmem:[#allocation11 + $0x338] sm:$0xff]
    %v606 = vld [vmem:[#allocation11 + $0x340] sm:$0xff]
    %v607 = vld [vmem:[#allocation11 + $0x348] sm:$0xff]
    %v608 = vld [vmem:[#allocation11 + $0x350] sm:$0xff]
    %v609 = vld [vmem:[#allocation11 + $0x358] sm:$0xff]
    %v610 = vld [vmem:[#allocation11 + $0x360] sm:$0xff]
    %v611 = vld [vmem:[#allocation11 + $0x368] sm:$0xff]
    %v612 = vld [vmem:[#allocation11 + $0x370] sm:$0xff]
    %v613 = vld [vmem:[#allocation11 + $0x378] sm:$0xff]
    %v614 = vld [vmem:[#allocation11 + $0x380] sm:$0xff]
    %v615 = vld [vmem:[#allocation11 + $0x388] sm:$0xff]
    %v616 = vld [vmem:[#allocation11 + $0x390] sm:$0xff]
    %v617 = vld [vmem:[#allocation11 + $0x398] sm:$0xff]
    %v618 = vld [vmem:[#allocation11 + $0x3a0] sm:$0xff]
    %v619 = vld [vmem:[#allocation11 + $0x3a8] sm:$0xff]
    %v620 = vld [vmem:[#allocation11 + $0x3b0] sm:$0xff]
    %v621 = vld [vmem:[#allocation11 + $0x3b8] sm:$0xff]
    %v622 = vld [vmem:[#allocation11 + $0x3c0] sm:$0xff]
    %v623 = vld [vmem:[#allocation11 + $0x3c8] sm:$0xff]
    %v624 = vld [vmem:[#allocation11 + $0x3d0] sm:$0xff]
    %v625 = vld [vmem:[#allocation11 + $0x3d8] sm:$0xff]
    %v626 = vld [vmem:[#allocation11 + $0x3e0] sm:$0xff]
    %v627 = vld [vmem:[#allocation11 + $0x3e8] sm:$0xff]
    %v628 = vld [vmem:[#allocation11 + $0x3f0] sm:$0xff]
    %v629 = vld [vmem:[#allocation11 + $0x3f8] sm:$0xff]
    %v630 = vld [vmem:[#allocation13] sm:$0xf]
    %v632 = vperm.slane %v630, 0
    %v633 = vperm.slane %v630, 1
    %v634 = vperm.slane %v630, 2
    %v635 = vperm.slane %v630, 3
    %v768 = vunpack.c.l.b16 %v502
    %v769 = vunpack.c.h.b16 %v502
    %v770 = vunpack.c.l.b16 %v503
    %v771 = vunpack.c.h.b16 %v503
    %v772 = vunpack.c.l.b16 %v504
    %v773 = vunpack.c.h.b16 %v504
    %v774 = vunpack.c.l.b16 %v505
    %v775 = vunpack.c.h.b16 %v505
    %v776 = vunpack.c.l.b16 %v506
    %v777 = vunpack.c.h.b16 %v506
    %v778 = vunpack.c.l.b16 %v507
    %v779 = vunpack.c.h.b16 %v507
    %v780 = vunpack.c.l.b16 %v508
    %v781 = vunpack.c.h.b16 %v508
    %v782 = vunpack.c.l.b16 %v509
    %v783 = vunpack.c.h.b16 %v509
    %v784 = vunpack.c.l.b16 %v510
    %v785 = vunpack.c.h.b16 %v510
    %v786 = vunpack.c.l.b16 %v511
    %v787 = vunpack.c.h.b16 %v511
    %v788 = vunpack.c.l.b16 %v512
    %v789 = vunpack.c.h.b16 %v512
    %v790 = vunpack.c.l.b16 %v513
    %v791 = vunpack.c.h.b16 %v513
    %v792 = vunpack.c.l.b16 %v514
    %v793 = vunpack.c.h.b16 %v514
    %v794 = vunpack.c.l.b16 %v515
    %v795 = vunpack.c.h.b16 %v515
    %v796 = vunpack.c.l.b16 %v516
    %v797 = vunpack.c.h.b16 %v516
    %v798 = vunpack.c.l.b16 %v517
    %v799 = vunpack.c.h.b16 %v517
    %v800 = vunpack.c.l.b16 %v518
    %v801 = vunpack.c.h.b16 %v518
    %v802 = vunpack.c.l.b16 %v519
    %v803 = vunpack.c.h.b16 %v519
    %v804 = vunpack.c.l.b16 %v520
    %v805 = vunpack.c.h.b16 %v520
    %v806 = vunpack.c.l.b16 %v521
    %v807 = vunpack.c.h.b16 %v521
    %v808 = vunpack.c.l.b16 %v522
    %v809 = vunpack.c.h.b16 %v522
    %v810 = vunpack.c.l.b16 %v523
    %v811 = vunpack.c.h.b16 %v523
    %v812 = vunpack.c.l.b16 %v524
    %v813 = vunpack.c.h.b16 %v524
    %v814 = vunpack.c.l.b16 %v525
    %v815 = vunpack.c.h.b16 %v525
    %v816 = vunpack.c.l.b16 %v526
    %v817 = vunpack.c.h.b16 %v526
    %v818 = vunpack.c.l.b16 %v527
    %v819 = vunpack.c.h.b16 %v527
    %v820 = vunpack.c.l.b16 %v528
    %v821 = vunpack.c.h.b16 %v528
    %v822 = vunpack.c.l.b16 %v529
    %v823 = vunpack.c.h.b16 %v529
    %v824 = vunpack.c.l.b16 %v530
    %v825 = vunpack.c.h.b16 %v530
    %v826 = vunpack.c.l.b16 %v531
    %v827 = vunpack.c.h.b16 %v531
    %v828 = vunpack.c.l.b16 %v532
    %v829 = vunpack.c.h.b16 %v532
    %v830 = vunpack.c.l.b16 %v533
    %v831 = vunpack.c.h.b16 %v533
    %v832 = vunpack.c.l.b16 %v534
    %v833 = vunpack.c.h.b16 %v534
    %v834 = vunpack.c.l.b16 %v535
    %v835 = vunpack.c.h.b16 %v535
    %v836 = vunpack.c.l.b16 %v536
    %v837 = vunpack.c.h.b16 %v536
    %v838 = vunpack.c.l.b16 %v537
    %v839 = vunpack.c.h.b16 %v537
    %v840 = vunpack.c.l.b16 %v538
    %v841 = vunpack.c.h.b16 %v538
    %v842 = vunpack.c.l.b16 %v539
    %v843 = vunpack.c.h.b16 %v539
    %v844 = vunpack.c.l.b16 %v540
    %v845 = vunpack.c.h.b16 %v540
    %v846 = vunpack.c.l.b16 %v541
    %v847 = vunpack.c.h.b16 %v541
    %v848 = vunpack.c.l.b16 %v542
    %v849 = vunpack.c.h.b16 %v542
    %v850 = vunpack.c.l.b16 %v543
    %v851 = vunpack.c.h.b16 %v543
    %v852 = vunpack.c.l.b16 %v544
    %v853 = vunpack.c.h.b16 %v544
    %v854 = vunpack.c.l.b16 %v545
    %v855 = vunpack.c.h.b16 %v545
    %v856 = vunpack.c.l.b16 %v546
    %v857 = vunpack.c.h.b16 %v546
    %v858 = vunpack.c.l.b16 %v547
    %v859 = vunpack.c.h.b16 %v547
    %v860 = vunpack.c.l.b16 %v548
    %v861 = vunpack.c.h.b16 %v548
    %v862 = vunpack.c.l.b16 %v549
    %v863 = vunpack.c.h.b16 %v549
    %v864 = vunpack.c.l.b16 %v550
    %v865 = vunpack.c.h.b16 %v550
    %v866 = vunpack.c.l.b16 %v551
    %v867 = vunpack.c.h.b16 %v551
    %v868 = vunpack.c.l.b16 %v552
    %v869 = vunpack.c.h.b16 %v552
    %v870 = vunpack.c.l.b16 %v553
    %v871 = vunpack.c.h.b16 %v553
    %v872 = vunpack.c.l.b16 %v554
    %v873 = vunpack.c.h.b16 %v554
    %v874 = vunpack.c.l.b16 %v555
    %v875 = vunpack.c.h.b16 %v555
    %v876 = vunpack.c.l.b16 %v556
    %v877 = vunpack.c.h.b16 %v556
    %v878 = vunpack.c.l.b16 %v557
    %v879 = vunpack.c.h.b16 %v557
    %v880 = vunpack.c.l.b16 %v558
    %v881 = vunpack.c.h.b16 %v558
    %v882 = vunpack.c.l.b16 %v559
    %v883 = vunpack.c.h.b16 %v559
    %v884 = vunpack.c.l.b16 %v560
    %v885 = vunpack.c.h.b16 %v560
    %v886 = vunpack.c.l.b16 %v561
    %v887 = vunpack.c.h.b16 %v561
    %v888 = vunpack.c.l.b16 %v562
    %v889 = vunpack.c.h.b16 %v562
    %v890 = vunpack.c.l.b16 %v563
    %v891 = vunpack.c.h.b16 %v563
    %v892 = vunpack.c.l.b16 %v564
    %v893 = vunpack.c.h.b16 %v564
    %v894 = vunpack.c.l.b16 %v565
    %v895 = vunpack.c.h.b16 %v565
    %v896 = vunpack.c.l.b16 %v566
    %v897 = vunpack.c.h.b16 %v566
    %v898 = vunpack.c.l.b16 %v567
    %v899 = vunpack.c.h.b16 %v567
    %v900 = vunpack.c.l.b16 %v568
    %v901 = vunpack.c.h.b16 %v568
    %v902 = vunpack.c.l.b16 %v569
    %v903 = vunpack.c.h.b16 %v569
    %v904 = vunpack.c.l.b16 %v570
    %v905 = vunpack.c.h.b16 %v570
    %v906 = vunpack.c.l.b16 %v571
    %v907 = vunpack.c.h.b16 %v571
    %v908 = vunpack.c.l.b16 %v572
    %v909 = vunpack.c.h.b16 %v572
    %v910 = vunpack.c.l.b16 %v573
    %v911 = vunpack.c.h.b16 %v573
    %v912 = vunpack.c.l.b16 %v574
    %v913 = vunpack.c.h.b16 %v574
    %v914 = vunpack.c.l.b16 %v575
    %v915 = vunpack.c.h.b16 %v575
    %v916 = vunpack.c.l.b16 %v576
    %v917 = vunpack.c.h.b16 %v576
    %v918 = vunpack.c.l.b16 %v577
    %v919 = vunpack.c.h.b16 %v577
    %v920 = vunpack.c.l.b16 %v578
    %v921 = vunpack.c.h.b16 %v578
    %v922 = vunpack.c.l.b16 %v579
    %v923 = vunpack.c.h.b16 %v579
    %v924 = vunpack.c.l.b16 %v580
    %v925 = vunpack.c.h.b16 %v580
    %v926 = vunpack.c.l.b16 %v581
    %v927 = vunpack.c.h.b16 %v581
    %v928 = vunpack.c.l.b16 %v582
    %v929 = vunpack.c.h.b16 %v582
    %v930 = vunpack.c.l.b16 %v583
    %v931 = vunpack.c.h.b16 %v583
    %v932 = vunpack.c.l.b16 %v584
    %v933 = vunpack.c.h.b16 %v584
    %v934 = vunpack.c.l.b16 %v585
    %v935 = vunpack.c.h.b16 %v585
    %v936 = vunpack.c.l.b16 %v586
    %v937 = vunpack.c.h.b16 %v586
    %v938 = vunpack.c.l.b16 %v587
    %v939 = vunpack.c.h.b16 %v587
    %v940 = vunpack.c.l.b16 %v588
    %v941 = vunpack.c.h.b16 %v588
    %v942 = vunpack.c.l.b16 %v589
    %v943 = vunpack.c.h.b16 %v589
    %v944 = vunpack.c.l.b16 %v590
    %v945 = vunpack.c.h.b16 %v590
    %v946 = vunpack.c.l.b16 %v591
    %v947 = vunpack.c.h.b16 %v591
    %v948 = vunpack.c.l.b16 %v592
    %v949 = vunpack.c.h.b16 %v592
    %v950 = vunpack.c.l.b16 %v593
    %v951 = vunpack.c.h.b16 %v593
    %v952 = vunpack.c.l.b16 %v594
    %v953 = vunpack.c.h.b16 %v594
    %v954 = vunpack.c.l.b16 %v595
    %v955 = vunpack.c.h.b16 %v595
    %v956 = vunpack.c.l.b16 %v596
    %v957 = vunpack.c.h.b16 %v596
    %v958 = vunpack.c.l.b16 %v597
    %v959 = vunpack.c.h.b16 %v597
    %v960 = vunpack.c.l.b16 %v598
    %v961 = vunpack.c.h.b16 %v598
    %v962 = vunpack.c.l.b16 %v599
    %v963 = vunpack.c.h.b16 %v599
    %v964 = vunpack.c.l.b16 %v600
    %v965 = vunpack.c.h.b16 %v600
    %v966 = vunpack.c.l.b16 %v601
    %v967 = vunpack.c.h.b16 %v601
    %v968 = vunpack.c.l.b16 %v602
    %v969 = vunpack.c.h.b16 %v602
    %v970 = vunpack.c.l.b16 %v603
    %v971 = vunpack.c.h.b16 %v603
    %v972 = vunpack.c.l.b16 %v604
    %v973 = vunpack.c.h.b16 %v604
    %v974 = vunpack.c.l.b16 %v605
    %v975 = vunpack.c.h.b16 %v605
    %v976 = vunpack.c.l.b16 %v606
    %v977 = vunpack.c.h.b16 %v606
    %v978 = vunpack.c.l.b16 %v607
    %v979 = vunpack.c.h.b16 %v607
    %v980 = vunpack.c.l.b16 %v608
    %v981 = vunpack.c.h.b16 %v608
    %v982 = vunpack.c.l.b16 %v609
    %v983 = vunpack.c.h.b16 %v609
    %v984 = vunpack.c.l.b16 %v610
    %v985 = vunpack.c.h.b16 %v610
    %v986 = vunpack.c.l.b16 %v611
    %v987 = vunpack.c.h.b16 %v611
    %v988 = vunpack.c.l.b16 %v612
    %v989 = vunpack.c.h.b16 %v612
    %v990 = vunpack.c.l.b16 %v613
    %v991 = vunpack.c.h.b16 %v613
    %v992 = vunpack.c.l.b16 %v614
    %v993 = vunpack.c.h.b16 %v614
    %v994 = vunpack.c.l.b16 %v615
    %v995 = vunpack.c.h.b16 %v615
    %v996 = vunpack.c.l.b16 %v616
    %v997 = vunpack.c.h.b16 %v616
    %v998 = vunpack.c.l.b16 %v617
    %v999 = vunpack.c.h.b16 %v617
    %v1000 = vunpack.c.l.b16 %v618
    %v1001 = vunpack.c.h.b16 %v618
    %v1002 = vunpack.c.l.b16 %v619
    %v1003 = vunpack.c.h.b16 %v619
    %v1004 = vunpack.c.l.b16 %v620
    %v1005 = vunpack.c.h.b16 %v620
    %v1006 = vunpack.c.l.b16 %v621
    %v1007 = vunpack.c.h.b16 %v621
    %v1008 = vunpack.c.l.b16 %v622
    %v1009 = vunpack.c.h.b16 %v622
    %v1010 = vunpack.c.l.b16 %v623
    %v1011 = vunpack.c.h.b16 %v623
    %v1012 = vunpack.c.l.b16 %v624
    %v1013 = vunpack.c.h.b16 %v624
    %v1014 = vunpack.c.l.b16 %v625
    %v1015 = vunpack.c.h.b16 %v625
    %v1016 = vunpack.c.l.b16 %v626
    %v1017 = vunpack.c.h.b16 %v626
    %v1018 = vunpack.c.l.b16 %v627
    %v1019 = vunpack.c.h.b16 %v627
    %v1020 = vunpack.c.l.b16 %v628
    %v1021 = vunpack.c.h.b16 %v628
    %v1022 = vunpack.c.l.b16 %v629
    %v1023 = vunpack.c.h.b16 %v629
    %v1024 = vpack.c.b16 %v772, %v768
    %v1025 = vpack.c.b16 %v773, %v769
    %v1026 = vpack.c.b16 %v774, %v770
    %v1027 = vpack.c.b16 %v775, %v771
    %v1028 = vpack.c.b16 %v780, %v776
    %v1029 = vpack.c.b16 %v781, %v777
    %v1030 = vpack.c.b16 %v782, %v778
    %v1031 = vpack.c.b16 %v783, %v779
    %v1032 = vpack.c.b16 %v788, %v784
    %v1033 = vpack.c.b16 %v789, %v785
    %v1034 = vpack.c.b16 %v790, %v786
    %v1035 = vpack.c.b16 %v791, %v787
    %v1036 = vpack.c.b16 %v796, %v792
    %v1037 = vpack.c.b16 %v797, %v793
    %v1038 = vpack.c.b16 %v798, %v794
    %v1039 = vpack.c.b16 %v799, %v795
    %v1040 = vpack.c.b16 %v804, %v800
    %v1041 = vpack.c.b16 %v805, %v801
    %v1042 = vpack.c.b16 %v806, %v802
    %v1043 = vpack.c.b16 %v807, %v803
    %v1044 = vpack.c.b16 %v812, %v808
    %v1045 = vpack.c.b16 %v813, %v809
    %v1046 = vpack.c.b16 %v814, %v810
    %v1047 = vpack.c.b16 %v815, %v811
    %v1048 = vpack.c.b16 %v820, %v816
    %v1049 = vpack.c.b16 %v821, %v817
    %v1050 = vpack.c.b16 %v822, %v818
    %v1051 = vpack.c.b16 %v823, %v819
    %v1052 = vpack.c.b16 %v828, %v824
    %v1053 = vpack.c.b16 %v829, %v825
    %v1054 = vpack.c.b16 %v830, %v826
    %v1055 = vpack.c.b16 %v831, %v827
    %v1056 = vpack.c.b16 %v836, %v832
    %v1057 = vpack.c.b16 %v837, %v833
    %v1058 = vpack.c.b16 %v838, %v834
    %v1059 = vpack.c.b16 %v839, %v835
    %v1060 = vpack.c.b16 %v844, %v840
    %v1061 = vpack.c.b16 %v845, %v841
    %v1062 = vpack.c.b16 %v846, %v842
    %v1063 = vpack.c.b16 %v847, %v843
    %v1064 = vpack.c.b16 %v852, %v848
    %v1065 = vpack.c.b16 %v853, %v849
    %v1066 = vpack.c.b16 %v854, %v850
    %v1067 = vpack.c.b16 %v855, %v851
    %v1068 = vpack.c.b16 %v860, %v856
    %v1069 = vpack.c.b16 %v861, %v857
    %v1070 = vpack.c.b16 %v862, %v858
    %v1071 = vpack.c.b16 %v863, %v859
    %v1072 = vpack.c.b16 %v868, %v864
    %v1073 = vpack.c.b16 %v869, %v865
    %v1074 = vpack.c.b16 %v870, %v866
    %v1075 = vpack.c.b16 %v871, %v867
    %v1076 = vpack.c.b16 %v876, %v872
    %v1077 = vpack.c.b16 %v877, %v873
    %v1078 = vpack.c.b16 %v878, %v874
    %v1079 = vpack.c.b16 %v879, %v875
    %v1080 = vpack.c.b16 %v884, %v880
    %v1081 = vpack.c.b16 %v885, %v881
    %v1082 = vpack.c.b16 %v886, %v882
    %v1083 = vpack.c.b16 %v887, %v883
    %v1084 = vpack.c.b16 %v892, %v888
    %v1085 = vpack.c.b16 %v893, %v889
    %v1086 = vpack.c.b16 %v894, %v890
    %v1087 = vpack.c.b16 %v895, %v891
    %v1088 = vpack.c.b16 %v900, %v896
    %v1089 = vpack.c.b16 %v901, %v897
    %v1090 = vpack.c.b16 %v902, %v898
    %v1091 = vpack.c.b16 %v903, %v899
    %v1092 = vpack.c.b16 %v908, %v904
    %v1093 = vpack.c.b16 %v909, %v905
    %v1094 = vpack.c.b16 %v910, %v906
    %v1095 = vpack.c.b16 %v911, %v907
    %v1096 = vpack.c.b16 %v916, %v912
    %v1097 = vpack.c.b16 %v917, %v913
    %v1098 = vpack.c.b16 %v918, %v914
    %v1099 = vpack.c.b16 %v919, %v915
    %v1100 = vpack.c.b16 %v924, %v920
    %v1101 = vpack.c.b16 %v925, %v921
    %v1102 = vpack.c.b16 %v926, %v922
    %v1103 = vpack.c.b16 %v927, %v923
    %v1104 = vpack.c.b16 %v932, %v928
    %v1105 = vpack.c.b16 %v933, %v929
    %v1106 = vpack.c.b16 %v934, %v930
    %v1107 = vpack.c.b16 %v935, %v931
    %v1108 = vpack.c.b16 %v940, %v936
    %v1109 = vpack.c.b16 %v941, %v937
    %v1110 = vpack.c.b16 %v942, %v938
    %v1111 = vpack.c.b16 %v943, %v939
    %v1112 = vpack.c.b16 %v948, %v944
    %v1113 = vpack.c.b16 %v949, %v945
    %v1114 = vpack.c.b16 %v950, %v946
    %v1115 = vpack.c.b16 %v951, %v947
    %v1116 = vpack.c.b16 %v956, %v952
    %v1117 = vpack.c.b16 %v957, %v953
    %v1118 = vpack.c.b16 %v958, %v954
    %v1119 = vpack.c.b16 %v959, %v955
    %v1120 = vpack.c.b16 %v964, %v960
    %v1121 = vpack.c.b16 %v965, %v961
    %v1122 = vpack.c.b16 %v966, %v962
    %v1123 = vpack.c.b16 %v967, %v963
    %v1124 = vpack.c.b16 %v972, %v968
    %v1125 = vpack.c.b16 %v973, %v969
    %v1126 = vpack.c.b16 %v974, %v970
    %v1127 = vpack.c.b16 %v975, %v971
    %v1128 = vpack.c.b16 %v980, %v976
    %v1129 = vpack.c.b16 %v981, %v977
    %v1130 = vpack.c.b16 %v982, %v978
    %v1131 = vpack.c.b16 %v983, %v979
    %v1132 = vpack.c.b16 %v988, %v984
    %v1133 = vpack.c.b16 %v989, %v985
    %v1134 = vpack.c.b16 %v990, %v986
    %v1135 = vpack.c.b16 %v991, %v987
    %v1136 = vpack.c.b16 %v996, %v992
    %v1137 = vpack.c.b16 %v997, %v993
    %v1138 = vpack.c.b16 %v998, %v994
    %v1139 = vpack.c.b16 %v999, %v995
    %v1140 = vpack.c.b16 %v1004, %v1000
    %v1141 = vpack.c.b16 %v1005, %v1001
    %v1142 = vpack.c.b16 %v1006, %v1002
    %v1143 = vpack.c.b16 %v1007, %v1003
    %v1144 = vpack.c.b16 %v1012, %v1008
    %v1145 = vpack.c.b16 %v1013, %v1009
    %v1146 = vpack.c.b16 %v1014, %v1010
    %v1147 = vpack.c.b16 %v1015, %v1011
    %v1148 = vpack.c.b16 %v1020, %v1016
    %v1149 = vpack.c.b16 %v1021, %v1017
    %v1150 = vpack.c.b16 %v1022, %v1018
    %v1151 = vpack.c.b16 %v1023, %v1019
    %1280 = vmatpush.bf16.msra.mxu0 %v1052
    %1281 = vmatpush.bf16.msra.mxu0 %v1048
    %1282 = vmatpush.bf16.msra.mxu0 %v1044
    %1283 = vmatpush.bf16.msra.mxu0 %v1040
    %1284 = vmatpush.bf16.msra.mxu0 %v1036
    %1285 = vmatpush.bf16.msra.mxu0 %v1032
    %1286 = vmatpush.bf16.msra.mxu0 %v1028
    %1287 = vmatpush.bf16.msra.mxu0 %v1024
    %1288 = vmatmul.bf16.gmra.mxu0 %v498
    %v1289 = vpop.f32.mrf.mxu0
    %v1290 = vadd.f32 %v632, %v1289
    %v1291 = vpop.f32.mrf.mxu0
    %1292 = vdwg.mxu0
    %1293 = vmatpush.bf16.msra.mxu0 %v1084
    %1294 = vmatpush.bf16.msra.mxu0 %v1080
    %1295 = vmatpush.bf16.msra.mxu0 %v1076
    %1296 = vmatpush.bf16.msra.mxu0 %v1072
    %1297 = vmatpush.bf16.msra.mxu0 %v1068
    %1298 = vmatpush.bf16.msra.mxu0 %v1064
    %1299 = vmatpush.bf16.msra.mxu0 %v1060
    %1300 = vmatpush.bf16.msra.mxu0 %v1056
    %1301 = vmatmul.bf16.gmra.mxu0 %v499
    %v1302 = vpop.f32.mrf.mxu0
    %v1303 = vadd.f32 %v1290, %v1302
    %v1304 = vpop.f32.mrf.mxu0
    %1305 = vdwg.mxu0
    %1306 = vmatpush.bf16.msra.mxu0 %v1116
    %1307 = vmatpush.bf16.msra.mxu0 %v1112
    %1308 = vmatpush.bf16.msra.mxu0 %v1108
    %1309 = vmatpush.bf16.msra.mxu0 %v1104
    %1310 = vmatpush.bf16.msra.mxu0 %v1100
    %1311 = vmatpush.bf16.msra.mxu0 %v1096
    %1312 = vmatpush.bf16.msra.mxu0 %v1092
    %1313 = vmatpush.bf16.msra.mxu0 %v1088
    %1314 = vmatmul.bf16.gmra.mxu0 %v500
    %v1315 = vpop.f32.mrf.mxu0
    %v1316 = vadd.f32 %v1303, %v1315
    %v1317 = vpop.f32.mrf.mxu0
    %1318 = vdwg.mxu0
    %1319 = vmatpush.bf16.msra.mxu0 %v1148
    %1320 = vmatpush.bf16.msra.mxu0 %v1144
    %1321 = vmatpush.bf16.msra.mxu0 %v1140
    %1322 = vmatpush.bf16.msra.mxu0 %v1136
    %1323 = vmatpush.bf16.msra.mxu0 %v1132
    %1324 = vmatpush.bf16.msra.mxu0 %v1128
    %1325 = vmatpush.bf16.msra.mxu0 %v1124
    %1326 = vmatpush.bf16.msra.mxu0 %v1120
    %1327 = vmatmul.bf16.gmra.mxu0 %v501
    %v1328 = vpop.f32.mrf.mxu0
    %v1329 = vadd.f32 %v1316, %v1328
    %v1330 = vpop.f32.mrf.mxu0
    %1331 = vdwg.mxu0
    %1332 = vmatpush.bf16.msra.mxu0 %v1053
    %1333 = vmatpush.bf16.msra.mxu0 %v1049
    %1334 = vmatpush.bf16.msra.mxu0 %v1045
    %1335 = vmatpush.bf16.msra.mxu0 %v1041
    %1336 = vmatpush.bf16.msra.mxu0 %v1037
    %1337 = vmatpush.bf16.msra.mxu0 %v1033
    %1338 = vmatpush.bf16.msra.mxu0 %v1029
    %1339 = vmatpush.bf16.msra.mxu0 %v1025
    %1340 = vmatmul.bf16.gmra.mxu0 %v498
    %v1341 = vpop.f32.mrf.mxu0
    %v1342 = vadd.f32 %v633, %v1341
    %v1343 = vpop.f32.mrf.mxu0
    %1344 = vdwg.mxu0
    %1345 = vmatpush.bf16.msra.mxu0 %v1085
    %1346 = vmatpush.bf16.msra.mxu0 %v1081
    %1347 = vmatpush.bf16.msra.mxu0 %v1077
    %1348 = vmatpush.bf16.msra.mxu0 %v1073
    %1349 = vmatpush.bf16.msra.mxu0 %v1069
    %1350 = vmatpush.bf16.msra.mxu0 %v1065
    %1351 = vmatpush.bf16.msra.mxu0 %v1061
    %1352 = vmatpush.bf16.msra.mxu0 %v1057
    %1353 = vmatmul.bf16.gmra.mxu0 %v499
    %v1354 = vpop.f32.mrf.mxu0
    %v1355 = vadd.f32 %v1342, %v1354
    %v1356 = vpop.f32.mrf.mxu0
    %1357 = vdwg.mxu0
    %1358 = vmatpush.bf16.msra.mxu0 %v1117
    %1359 = vmatpush.bf16.msra.mxu0 %v1113
    %1360 = vmatpush.bf16.msra.mxu0 %v1109
    %1361 = vmatpush.bf16.msra.mxu0 %v1105
    %1362 = vmatpush.bf16.msra.mxu0 %v1101
    %1363 = vmatpush.bf16.msra.mxu0 %v1097
    %1364 = vmatpush.bf16.msra.mxu0 %v1093
    %1365 = vmatpush.bf16.msra.mxu0 %v1089
    %1366 = vmatmul.bf16.gmra.mxu0 %v500
    %v1367 = vpop.f32.mrf.mxu0
    %v1368 = vadd.f32 %v1355, %v1367
    %v1369 = vpop.f32.mrf.mxu0
    %1370 = vdwg.mxu0
    %1371 = vmatpush.bf16.msra.mxu0 %v1149
    %1372 = vmatpush.bf16.msra.mxu0 %v1145
    %1373 = vmatpush.bf16.msra.mxu0 %v1141
    %1374 = vmatpush.bf16.msra.mxu0 %v1137
    %1375 = vmatpush.bf16.msra.mxu0 %v1133
    %1376 = vmatpush.bf16.msra.mxu0 %v1129
    %1377 = vmatpush.bf16.msra.mxu0 %v1125
    %1378 = vmatpush.bf16.msra.mxu0 %v1121
    %1379 = vmatmul.bf16.gmra.mxu0 %v501
    %v1380 = vpop.f32.mrf.mxu0
    %v1381 = vadd.f32 %v1368, %v1380
    %v1382 = vpop.f32.mrf.mxu0
    %1383 = vdwg.mxu0
    %1384 = vmatpush.bf16.msra.mxu0 %v1054
    %1385 = vmatpush.bf16.msra.mxu0 %v1050
    %1386 = vmatpush.bf16.msra.mxu0 %v1046
    %1387 = vmatpush.bf16.msra.mxu0 %v1042
    %1388 = vmatpush.bf16.msra.mxu0 %v1038
    %1389 = vmatpush.bf16.msra.mxu0 %v1034
    %1390 = vmatpush.bf16.msra.mxu0 %v1030
    %1391 = vmatpush.bf16.msra.mxu0 %v1026
    %1392 = vmatmul.bf16.gmra.mxu0 %v498
    %v1393 = vpop.f32.mrf.mxu0
    %v1394 = vadd.f32 %v634, %v1393
    %v1395 = vpop.f32.mrf.mxu0
    %1396 = vdwg.mxu0
    %1397 = vmatpush.bf16.msra.mxu0 %v1086
    %1398 = vmatpush.bf16.msra.mxu0 %v1082
    %1399 = vmatpush.bf16.msra.mxu0 %v1078
    %1400 = vmatpush.bf16.msra.mxu0 %v1074
    %1401 = vmatpush.bf16.msra.mxu0 %v1070
    %1402 = vmatpush.bf16.msra.mxu0 %v1066
    %1403 = vmatpush.bf16.msra.mxu0 %v1062
    %1404 = vmatpush.bf16.msra.mxu0 %v1058
    %1405 = vmatmul.bf16.gmra.mxu0 %v499
    %v1406 = vpop.f32.mrf.mxu0
    %v1407 = vadd.f32 %v1394, %v1406
    %v1408 = vpop.f32.mrf.mxu0
    %1409 = vdwg.mxu0
    %1410 = vmatpush.bf16.msra.mxu0 %v1118
    %1411 = vmatpush.bf16.msra.mxu0 %v1114
    %1412 = vmatpush.bf16.msra.mxu0 %v1110
    %1413 = vmatpush.bf16.msra.mxu0 %v1106
    %1414 = vmatpush.bf16.msra.mxu0 %v1102
    %1415 = vmatpush.bf16.msra.mxu0 %v1098
    %1416 = vmatpush.bf16.msra.mxu0 %v1094
    %1417 = vmatpush.bf16.msra.mxu0 %v1090
    %1418 = vmatmul.bf16.gmra.mxu0 %v500
    %v1419 = vpop.f32.mrf.mxu0
    %v1420 = vadd.f32 %v1407, %v1419
    %v1421 = vpop.f32.mrf.mxu0
    %1422 = vdwg.mxu0
    %1423 = vmatpush.bf16.msra.mxu0 %v1150
    %1424 = vmatpush.bf16.msra.mxu0 %v1146
    %1425 = vmatpush.bf16.msra.mxu0 %v1142
    %1426 = vmatpush.bf16.msra.mxu0 %v1138
    %1427 = vmatpush.bf16.msra.mxu0 %v1134
    %1428 = vmatpush.bf16.msra.mxu0 %v1130
    %1429 = vmatpush.bf16.msra.mxu0 %v1126
    %1430 = vmatpush.bf16.msra.mxu0 %v1122
    %1431 = vmatmul.bf16.gmra.mxu0 %v501
    %v1432 = vpop.f32.mrf.mxu0
    %v1433 = vadd.f32 %v1420, %v1432
    %v1434 = vpop.f32.mrf.mxu0
    %1435 = vdwg.mxu0
    %1436 = vmatpush.bf16.msra.mxu0 %v1055
    %1437 = vmatpush.bf16.msra.mxu0 %v1051
    %1438 = vmatpush.bf16.msra.mxu0 %v1047
    %1439 = vmatpush.bf16.msra.mxu0 %v1043
    %1440 = vmatpush.bf16.msra.mxu0 %v1039
    %1441 = vmatpush.bf16.msra.mxu0 %v1035
    %1442 = vmatpush.bf16.msra.mxu0 %v1031
    %1443 = vmatpush.bf16.msra.mxu0 %v1027
    %1444 = vmatmul.bf16.gmra.mxu0 %v498
    %v1445 = vpop.f32.mrf.mxu0
    %v1446 = vadd.f32 %v635, %v1445
    %v1447 = vpop.f32.mrf.mxu0
    %1448 = vdwg.mxu0
    %1449 = vmatpush.bf16.msra.mxu0 %v1087
    %1450 = vmatpush.bf16.msra.mxu0 %v1083
    %1451 = vmatpush.bf16.msra.mxu0 %v1079
    %1452 = vmatpush.bf16.msra.mxu0 %v1075
    %1453 = vmatpush.bf16.msra.mxu0 %v1071
    %1454 = vmatpush.bf16.msra.mxu0 %v1067
    %1455 = vmatpush.bf16.msra.mxu0 %v1063
    %1456 = vmatpush.bf16.msra.mxu0 %v1059
    %1457 = vmatmul.bf16.gmra.mxu0 %v499
    %v1458 = vpop.f32.mrf.mxu0
    %v1459 = vadd.f32 %v1446, %v1458
    %v1460 = vpop.f32.mrf.mxu0
    %1461 = vdwg.mxu0
    %1462 = vmatpush.bf16.msra.mxu0 %v1119
    %1463 = vmatpush.bf16.msra.mxu0 %v1115
    %1464 = vmatpush.bf16.msra.mxu0 %v1111
    %1465 = vmatpush.bf16.msra.mxu0 %v1107
    %1466 = vmatpush.bf16.msra.mxu0 %v1103
    %1467 = vmatpush.bf16.msra.mxu0 %v1099
    %1468 = vmatpush.bf16.msra.mxu0 %v1095
    %1469 = vmatpush.bf16.msra.mxu0 %v1091
    %1470 = vmatmul.bf16.gmra.mxu0 %v500
    %v1471 = vpop.f32.mrf.mxu0
    %v1472 = vadd.f32 %v1459, %v1471
    %v1473 = vpop.f32.mrf.mxu0
    %1474 = vdwg.mxu0
    %1475 = vmatpush.bf16.msra.mxu0 %v1151
    %1476 = vmatpush.bf16.msra.mxu0 %v1147
    %1477 = vmatpush.bf16.msra.mxu0 %v1143
    %1478 = vmatpush.bf16.msra.mxu0 %v1139
    %1479 = vmatpush.bf16.msra.mxu0 %v1135
    %1480 = vmatpush.bf16.msra.mxu0 %v1131
    %1481 = vmatpush.bf16.msra.mxu0 %v1127
    %1482 = vmatpush.bf16.msra.mxu0 %v1123
    %1483 = vmatmul.bf16.gmra.mxu0 %v501
    %v1484 = vpop.f32.mrf.mxu0
    %v1485 = vadd.f32 %v1472, %v1484
    %v1486 = vpop.f32.mrf.mxu0
    %1487 = vdwg.mxu0
    %v1488 = vpack.c.bf16 %v494, %v494
    %v1489 = vpack.c.bf16 %v495, %v495
    %v1490 = vpack.c.bf16 %v496, %v496
    %v1491 = vpack.c.bf16 %v497, %v497
    %s1492 = scalar_lea.vmem [#allocation11], 1024
    %v1493 = vld [vmem:[%s1492] sm:$0xff]
    %v1494 = vld [vmem:[%s1492 + $0x8] sm:$0xff]
    %v1495 = vld [vmem:[%s1492 + $0x10] sm:$0xff]
    %v1496 = vld [vmem:[%s1492 + $0x18] sm:$0xff]
    %v1497 = vld [vmem:[%s1492 + $0x20] sm:$0xff]
    %v1498 = vld [vmem:[%s1492 + $0x28] sm:$0xff]
    %v1499 = vld [vmem:[%s1492 + $0x30] sm:$0xff]
    %v1500 = vld [vmem:[%s1492 + $0x38] sm:$0xff]
    %v1501 = vld [vmem:[%s1492 + $0x40] sm:$0xff]
    %v1502 = vld [vmem:[%s1492 + $0x48] sm:$0xff]
    %v1503 = vld [vmem:[%s1492 + $0x50] sm:$0xff]
    %v1504 = vld [vmem:[%s1492 + $0x58] sm:$0xff]
    %v1505 = vld [vmem:[%s1492 + $0x60] sm:$0xff]
    %v1506 = vld [vmem:[%s1492 + $0x68] sm:$0xff]
    %v1507 = vld [vmem:[%s1492 + $0x70] sm:$0xff]
    %v1508 = vld [vmem:[%s1492 + $0x78] sm:$0xff]
    %v1509 = vld [vmem:[%s1492 + $0x80] sm:$0xff]
    %v1510 = vld [vmem:[%s1492 + $0x88] sm:$0xff]
    %v1511 = vld [vmem:[%s1492 + $0x90] sm:$0xff]
    %v1512 = vld [vmem:[%s1492 + $0x98] sm:$0xff]
    %v1513 = vld [vmem:[%s1492 + $0xa0] sm:$0xff]
    %v1514 = vld [vmem:[%s1492 + $0xa8] sm:$0xff]
    %v1515 = vld [vmem:[%s1492 + $0xb0] sm:$0xff]
    %v1516 = vld [vmem:[%s1492 + $0xb8] sm:$0xff]
    %v1517 = vld [vmem:[%s1492 + $0xc0] sm:$0xff]
    %v1518 = vld [vmem:[%s1492 + $0xc8] sm:$0xff]
    %v1519 = vld [vmem:[%s1492 + $0xd0] sm:$0xff]
    %v1520 = vld [vmem:[%s1492 + $0xd8] sm:$0xff]
    %v1521 = vld [vmem:[%s1492 + $0xe0] sm:$0xff]
    %v1522 = vld [vmem:[%s1492 + $0xe8] sm:$0xff]
    %v1523 = vld [vmem:[%s1492 + $0xf0] sm:$0xff]
    %v1524 = vld [vmem:[%s1492 + $0xf8] sm:$0xff]
    %v1525 = vld [vmem:[%s1492 + $0x100] sm:$0xff]
    %v1526 = vld [vmem:[%s1492 + $0x108] sm:$0xff]
    %v1527 = vld [vmem:[%s1492 + $0x110] sm:$0xff]
    %v1528 = vld [vmem:[%s1492 + $0x118] sm:$0xff]
    %v1529 = vld [vmem:[%s1492 + $0x120] sm:$0xff]
    %v1530 = vld [vmem:[%s1492 + $0x128] sm:$0xff]
    %v1531 = vld [vmem:[%s1492 + $0x130] sm:$0xff]
    %v1532 = vld [vmem:[%s1492 + $0x138] sm:$0xff]
    %v1533 = vld [vmem:[%s1492 + $0x140] sm:$0xff]
    %v1534 = vld [vmem:[%s1492 + $0x148] sm:$0xff]
    %v1535 = vld [vmem:[%s1492 + $0x150] sm:$0xff]
    %v1536 = vld [vmem:[%s1492 + $0x158] sm:$0xff]
    %v1537 = vld [vmem:[%s1492 + $0x160] sm:$0xff]
    %v1538 = vld [vmem:[%s1492 + $0x168] sm:$0xff]
    %v1539 = vld [vmem:[%s1492 + $0x170] sm:$0xff]
    %v1540 = vld [vmem:[%s1492 + $0x178] sm:$0xff]
    %v1541 = vld [vmem:[%s1492 + $0x180] sm:$0xff]
    %v1542 = vld [vmem:[%s1492 + $0x188] sm:$0xff]
    %v1543 = vld [vmem:[%s1492 + $0x190] sm:$0xff]
    %v1544 = vld [vmem:[%s1492 + $0x198] sm:$0xff]
    %v1545 = vld [vmem:[%s1492 + $0x1a0] sm:$0xff]
    %v1546 = vld [vmem:[%s1492 + $0x1a8] sm:$0xff]
    %v1547 = vld [vmem:[%s1492 + $0x1b0] sm:$0xff]
    %v1548 = vld [vmem:[%s1492 + $0x1b8] sm:$0xff]
    %v1549 = vld [vmem:[%s1492 + $0x1c0] sm:$0xff]
    %v1550 = vld [vmem:[%s1492 + $0x1c8] sm:$0xff]
    %v1551 = vld [vmem:[%s1492 + $0x1d0] sm:$0xff]
    %v1552 = vld [vmem:[%s1492 + $0x1d8] sm:$0xff]
    %v1553 = vld [vmem:[%s1492 + $0x1e0] sm:$0xff]
    %v1554 = vld [vmem:[%s1492 + $0x1e8] sm:$0xff]
    %v1555 = vld [vmem:[%s1492 + $0x1f0] sm:$0xff]
    %v1556 = vld [vmem:[%s1492 + $0x1f8] sm:$0xff]
    %v1557 = vld [vmem:[%s1492 + $0x200] sm:$0xff]
    %v1558 = vld [vmem:[%s1492 + $0x208] sm:$0xff]
    %v1559 = vld [vmem:[%s1492 + $0x210] sm:$0xff]
    %v1560 = vld [vmem:[%s1492 + $0x218] sm:$0xff]
    %v1561 = vld [vmem:[%s1492 + $0x220] sm:$0xff]
    %v1562 = vld [vmem:[%s1492 + $0x228] sm:$0xff]
    %v1563 = vld [vmem:[%s1492 + $0x230] sm:$0xff]
    %v1564 = vld [vmem:[%s1492 + $0x238] sm:$0xff]
    %v1565 = vld [vmem:[%s1492 + $0x240] sm:$0xff]
    %v1566 = vld [vmem:[%s1492 + $0x248] sm:$0xff]
    %v1567 = vld [vmem:[%s1492 + $0x250] sm:$0xff]
    %v1568 = vld [vmem:[%s1492 + $0x258] sm:$0xff]
    %v1569 = vld [vmem:[%s1492 + $0x260] sm:$0xff]
    %v1570 = vld [vmem:[%s1492 + $0x268] sm:$0xff]
    %v1571 = vld [vmem:[%s1492 + $0x270] sm:$0xff]
    %v1572 = vld [vmem:[%s1492 + $0x278] sm:$0xff]
    %v1573 = vld [vmem:[%s1492 + $0x280] sm:$0xff]
    %v1574 = vld [vmem:[%s1492 + $0x288] sm:$0xff]
    %v1575 = vld [vmem:[%s1492 + $0x290] sm:$0xff]
    %v1576 = vld [vmem:[%s1492 + $0x298] sm:$0xff]
    %v1577 = vld [vmem:[%s1492 + $0x2a0] sm:$0xff]
    %v1578 = vld [vmem:[%s1492 + $0x2a8] sm:$0xff]
    %v1579 = vld [vmem:[%s1492 + $0x2b0] sm:$0xff]
    %v1580 = vld [vmem:[%s1492 + $0x2b8] sm:$0xff]
    %v1581 = vld [vmem:[%s1492 + $0x2c0] sm:$0xff]
    %v1582 = vld [vmem:[%s1492 + $0x2c8] sm:$0xff]
    %v1583 = vld [vmem:[%s1492 + $0x2d0] sm:$0xff]
    %v1584 = vld [vmem:[%s1492 + $0x2d8] sm:$0xff]
    %v1585 = vld [vmem:[%s1492 + $0x2e0] sm:$0xff]
    %v1586 = vld [vmem:[%s1492 + $0x2e8] sm:$0xff]
    %v1587 = vld [vmem:[%s1492 + $0x2f0] sm:$0xff]
    %v1588 = vld [vmem:[%s1492 + $0x2f8] sm:$0xff]
    %v1589 = vld [vmem:[%s1492 + $0x300] sm:$0xff]
    %v1590 = vld [vmem:[%s1492 + $0x308] sm:$0xff]
    %v1591 = vld [vmem:[%s1492 + $0x310] sm:$0xff]
    %v1592 = vld [vmem:[%s1492 + $0x318] sm:$0xff]
    %v1593 = vld [vmem:[%s1492 + $0x320] sm:$0xff]
    %v1594 = vld [vmem:[%s1492 + $0x328] sm:$0xff]
    %v1595 = vld [vmem:[%s1492 + $0x330] sm:$0xff]
    %v1596 = vld [vmem:[%s1492 + $0x338] sm:$0xff]
    %v1597 = vld [vmem:[%s1492 + $0x340] sm:$0xff]
    %v1598 = vld [vmem:[%s1492 + $0x348] sm:$0xff]
    %v1599 = vld [vmem:[%s1492 + $0x350] sm:$0xff]
    %v1600 = vld [vmem:[%s1492 + $0x358] sm:$0xff]
    %v1601 = vld [vmem:[%s1492 + $0x360] sm:$0xff]
    %v1602 = vld [vmem:[%s1492 + $0x368] sm:$0xff]
    %v1603 = vld [vmem:[%s1492 + $0x370] sm:$0xff]
    %v1604 = vld [vmem:[%s1492 + $0x378] sm:$0xff]
    %v1605 = vld [vmem:[%s1492 + $0x380] sm:$0xff]
    %v1606 = vld [vmem:[%s1492 + $0x388] sm:$0xff]
    %v1607 = vld [vmem:[%s1492 + $0x390] sm:$0xff]
    %v1608 = vld [vmem:[%s1492 + $0x398] sm:$0xff]
    %v1609 = vld [vmem:[%s1492 + $0x3a0] sm:$0xff]
    %v1610 = vld [vmem:[%s1492 + $0x3a8] sm:$0xff]
    %v1611 = vld [vmem:[%s1492 + $0x3b0] sm:$0xff]
    %v1612 = vld [vmem:[%s1492 + $0x3b8] sm:$0xff]
    %v1613 = vld [vmem:[%s1492 + $0x3c0] sm:$0xff]
    %v1614 = vld [vmem:[%s1492 + $0x3c8] sm:$0xff]
    %v1615 = vld [vmem:[%s1492 + $0x3d0] sm:$0xff]
    %v1616 = vld [vmem:[%s1492 + $0x3d8] sm:$0xff]
    %v1617 = vld [vmem:[%s1492 + $0x3e0] sm:$0xff]
    %v1618 = vld [vmem:[%s1492 + $0x3e8] sm:$0xff]
    %v1619 = vld [vmem:[%s1492 + $0x3f0] sm:$0xff]
    %v1620 = vld [vmem:[%s1492 + $0x3f8] sm:$0xff]
    %v1621 = vld [vmem:[#allocation13 + $0x4] sm:$0xf]
    %v1623 = vperm.slane %v1621, 0
    %v1624 = vperm.slane %v1621, 1
    %v1625 = vperm.slane %v1621, 2
    %v1626 = vperm.slane %v1621, 3
    %v1759 = vunpack.c.l.b16 %v1493
    %v1760 = vunpack.c.h.b16 %v1493
    %v1761 = vunpack.c.l.b16 %v1494
    %v1762 = vunpack.c.h.b16 %v1494
    %v1763 = vunpack.c.l.b16 %v1495
    %v1764 = vunpack.c.h.b16 %v1495
    %v1765 = vunpack.c.l.b16 %v1496
    %v1766 = vunpack.c.h.b16 %v1496
    %v1767 = vunpack.c.l.b16 %v1497
    %v1768 = vunpack.c.h.b16 %v1497
    %v1769 = vunpack.c.l.b16 %v1498
    %v1770 = vunpack.c.h.b16 %v1498
    %v1771 = vunpack.c.l.b16 %v1499
    %v1772 = vunpack.c.h.b16 %v1499
    %v1773 = vunpack.c.l.b16 %v1500
    %v1774 = vunpack.c.h.b16 %v1500
    %v1775 = vunpack.c.l.b16 %v1501
    %v1776 = vunpack.c.h.b16 %v1501
    %v1777 = vunpack.c.l.b16 %v1502
    %v1778 = vunpack.c.h.b16 %v1502
    %v1779 = vunpack.c.l.b16 %v1503
    %v1780 = vunpack.c.h.b16 %v1503
    %v1781 = vunpack.c.l.b16 %v1504
    %v1782 = vunpack.c.h.b16 %v1504
    %v1783 = vunpack.c.l.b16 %v1505
    %v1784 = vunpack.c.h.b16 %v1505
    %v1785 = vunpack.c.l.b16 %v1506
    %v1786 = vunpack.c.h.b16 %v1506
    %v1787 = vunpack.c.l.b16 %v1507
    %v1788 = vunpack.c.h.b16 %v1507
    %v1789 = vunpack.c.l.b16 %v1508
    %v1790 = vunpack.c.h.b16 %v1508
    %v1791 = vunpack.c.l.b16 %v1509
    %v1792 = vunpack.c.h.b16 %v1509
    %v1793 = vunpack.c.l.b16 %v1510
    %v1794 = vunpack.c.h.b16 %v1510
    %v1795 = vunpack.c.l.b16 %v1511
    %v1796 = vunpack.c.h.b16 %v1511
    %v1797 = vunpack.c.l.b16 %v1512
    %v1798 = vunpack.c.h.b16 %v1512
    %v1799 = vunpack.c.l.b16 %v1513
    %v1800 = vunpack.c.h.b16 %v1513
    %v1801 = vunpack.c.l.b16 %v1514
    %v1802 = vunpack.c.h.b16 %v1514
    %v1803 = vunpack.c.l.b16 %v1515
    %v1804 = vunpack.c.h.b16 %v1515
    %v1805 = vunpack.c.l.b16 %v1516
    %v1806 = vunpack.c.h.b16 %v1516
    %v1807 = vunpack.c.l.b16 %v1517
    %v1808 = vunpack.c.h.b16 %v1517
    %v1809 = vunpack.c.l.b16 %v1518
    %v1810 = vunpack.c.h.b16 %v1518
    %v1811 = vunpack.c.l.b16 %v1519
    %v1812 = vunpack.c.h.b16 %v1519
    %v1813 = vunpack.c.l.b16 %v1520
    %v1814 = vunpack.c.h.b16 %v1520
    %v1815 = vunpack.c.l.b16 %v1521
    %v1816 = vunpack.c.h.b16 %v1521
    %v1817 = vunpack.c.l.b16 %v1522
    %v1818 = vunpack.c.h.b16 %v1522
    %v1819 = vunpack.c.l.b16 %v1523
    %v1820 = vunpack.c.h.b16 %v1523
    %v1821 = vunpack.c.l.b16 %v1524
    %v1822 = vunpack.c.h.b16 %v1524
    %v1823 = vunpack.c.l.b16 %v1525
    %v1824 = vunpack.c.h.b16 %v1525
    %v1825 = vunpack.c.l.b16 %v1526
    %v1826 = vunpack.c.h.b16 %v1526
    %v1827 = vunpack.c.l.b16 %v1527
    %v1828 = vunpack.c.h.b16 %v1527
    %v1829 = vunpack.c.l.b16 %v1528
    %v1830 = vunpack.c.h.b16 %v1528
    %v1831 = vunpack.c.l.b16 %v1529
    %v1832 = vunpack.c.h.b16 %v1529
    %v1833 = vunpack.c.l.b16 %v1530
    %v1834 = vunpack.c.h.b16 %v1530
    %v1835 = vunpack.c.l.b16 %v1531
    %v1836 = vunpack.c.h.b16 %v1531
    %v1837 = vunpack.c.l.b16 %v1532
    %v1838 = vunpack.c.h.b16 %v1532
    %v1839 = vunpack.c.l.b16 %v1533
    %v1840 = vunpack.c.h.b16 %v1533
    %v1841 = vunpack.c.l.b16 %v1534
    %v1842 = vunpack.c.h.b16 %v1534
    %v1843 = vunpack.c.l.b16 %v1535
    %v1844 = vunpack.c.h.b16 %v1535
    %v1845 = vunpack.c.l.b16 %v1536
    %v1846 = vunpack.c.h.b16 %v1536
    %v1847 = vunpack.c.l.b16 %v1537
    %v1848 = vunpack.c.h.b16 %v1537
    %v1849 = vunpack.c.l.b16 %v1538
    %v1850 = vunpack.c.h.b16 %v1538
    %v1851 = vunpack.c.l.b16 %v1539
    %v1852 = vunpack.c.h.b16 %v1539
    %v1853 = vunpack.c.l.b16 %v1540
    %v1854 = vunpack.c.h.b16 %v1540
    %v1855 = vunpack.c.l.b16 %v1541
    %v1856 = vunpack.c.h.b16 %v1541
    %v1857 = vunpack.c.l.b16 %v1542
    %v1858 = vunpack.c.h.b16 %v1542
    %v1859 = vunpack.c.l.b16 %v1543
    %v1860 = vunpack.c.h.b16 %v1543
    %v1861 = vunpack.c.l.b16 %v1544
    %v1862 = vunpack.c.h.b16 %v1544
    %v1863 = vunpack.c.l.b16 %v1545
    %v1864 = vunpack.c.h.b16 %v1545
    %v1865 = vunpack.c.l.b16 %v1546
    %v1866 = vunpack.c.h.b16 %v1546
    %v1867 = vunpack.c.l.b16 %v1547
    %v1868 = vunpack.c.h.b16 %v1547
    %v1869 = vunpack.c.l.b16 %v1548
    %v1870 = vunpack.c.h.b16 %v1548
    %v1871 = vunpack.c.l.b16 %v1549
    %v1872 = vunpack.c.h.b16 %v1549
    %v1873 = vunpack.c.l.b16 %v1550
    %v1874 = vunpack.c.h.b16 %v1550
    %v1875 = vunpack.c.l.b16 %v1551
    %v1876 = vunpack.c.h.b16 %v1551
    %v1877 = vunpack.c.l.b16 %v1552
    %v1878 = vunpack.c.h.b16 %v1552
    %v1879 = vunpack.c.l.b16 %v1553
    %v1880 = vunpack.c.h.b16 %v1553
    %v1881 = vunpack.c.l.b16 %v1554
    %v1882 = vunpack.c.h.b16 %v1554
    %v1883 = vunpack.c.l.b16 %v1555
    %v1884 = vunpack.c.h.b16 %v1555
    %v1885 = vunpack.c.l.b16 %v1556
    %v1886 = vunpack.c.h.b16 %v1556
    %v1887 = vunpack.c.l.b16 %v1557
    %v1888 = vunpack.c.h.b16 %v1557
    %v1889 = vunpack.c.l.b16 %v1558
    %v1890 = vunpack.c.h.b16 %v1558
    %v1891 = vunpack.c.l.b16 %v1559
    %v1892 = vunpack.c.h.b16 %v1559
    %v1893 = vunpack.c.l.b16 %v1560
    %v1894 = vunpack.c.h.b16 %v1560
    %v1895 = vunpack.c.l.b16 %v1561
    %v1896 = vunpack.c.h.b16 %v1561
    %v1897 = vunpack.c.l.b16 %v1562
    %v1898 = vunpack.c.h.b16 %v1562
    %v1899 = vunpack.c.l.b16 %v1563
    %v1900 = vunpack.c.h.b16 %v1563
    %v1901 = vunpack.c.l.b16 %v1564
    %v1902 = vunpack.c.h.b16 %v1564
    %v1903 = vunpack.c.l.b16 %v1565
    %v1904 = vunpack.c.h.b16 %v1565
    %v1905 = vunpack.c.l.b16 %v1566
    %v1906 = vunpack.c.h.b16 %v1566
    %v1907 = vunpack.c.l.b16 %v1567
    %v1908 = vunpack.c.h.b16 %v1567
    %v1909 = vunpack.c.l.b16 %v1568
    %v1910 = vunpack.c.h.b16 %v1568
    %v1911 = vunpack.c.l.b16 %v1569
    %v1912 = vunpack.c.h.b16 %v1569
    %v1913 = vunpack.c.l.b16 %v1570
    %v1914 = vunpack.c.h.b16 %v1570
    %v1915 = vunpack.c.l.b16 %v1571
    %v1916 = vunpack.c.h.b16 %v1571
    %v1917 = vunpack.c.l.b16 %v1572
    %v1918 = vunpack.c.h.b16 %v1572
    %v1919 = vunpack.c.l.b16 %v1573
    %v1920 = vunpack.c.h.b16 %v1573
    %v1921 = vunpack.c.l.b16 %v1574
    %v1922 = vunpack.c.h.b16 %v1574
    %v1923 = vunpack.c.l.b16 %v1575
    %v1924 = vunpack.c.h.b16 %v1575
    %v1925 = vunpack.c.l.b16 %v1576
    %v1926 = vunpack.c.h.b16 %v1576
    %v1927 = vunpack.c.l.b16 %v1577
    %v1928 = vunpack.c.h.b16 %v1577
    %v1929 = vunpack.c.l.b16 %v1578
    %v1930 = vunpack.c.h.b16 %v1578
    %v1931 = vunpack.c.l.b16 %v1579
    %v1932 = vunpack.c.h.b16 %v1579
    %v1933 = vunpack.c.l.b16 %v1580
    %v1934 = vunpack.c.h.b16 %v1580
    %v1935 = vunpack.c.l.b16 %v1581
    %v1936 = vunpack.c.h.b16 %v1581
    %v1937 = vunpack.c.l.b16 %v1582
    %v1938 = vunpack.c.h.b16 %v1582
    %v1939 = vunpack.c.l.b16 %v1583
    %v1940 = vunpack.c.h.b16 %v1583
    %v1941 = vunpack.c.l.b16 %v1584
    %v1942 = vunpack.c.h.b16 %v1584
    %v1943 = vunpack.c.l.b16 %v1585
    %v1944 = vunpack.c.h.b16 %v1585
    %v1945 = vunpack.c.l.b16 %v1586
    %v1946 = vunpack.c.h.b16 %v1586
    %v1947 = vunpack.c.l.b16 %v1587
    %v1948 = vunpack.c.h.b16 %v1587
    %v1949 = vunpack.c.l.b16 %v1588
    %v1950 = vunpack.c.h.b16 %v1588
    %v1951 = vunpack.c.l.b16 %v1589
    %v1952 = vunpack.c.h.b16 %v1589
    %v1953 = vunpack.c.l.b16 %v1590
    %v1954 = vunpack.c.h.b16 %v1590
    %v1955 = vunpack.c.l.b16 %v1591
    %v1956 = vunpack.c.h.b16 %v1591
    %v1957 = vunpack.c.l.b16 %v1592
    %v1958 = vunpack.c.h.b16 %v1592
    %v1959 = vunpack.c.l.b16 %v1593
    %v1960 = vunpack.c.h.b16 %v1593
    %v1961 = vunpack.c.l.b16 %v1594
    %v1962 = vunpack.c.h.b16 %v1594
    %v1963 = vunpack.c.l.b16 %v1595
    %v1964 = vunpack.c.h.b16 %v1595
    %v1965 = vunpack.c.l.b16 %v1596
    %v1966 = vunpack.c.h.b16 %v1596
    %v1967 = vunpack.c.l.b16 %v1597
    %v1968 = vunpack.c.h.b16 %v1597
    %v1969 = vunpack.c.l.b16 %v1598
    %v1970 = vunpack.c.h.b16 %v1598
    %v1971 = vunpack.c.l.b16 %v1599
    %v1972 = vunpack.c.h.b16 %v1599
    %v1973 = vunpack.c.l.b16 %v1600
    %v1974 = vunpack.c.h.b16 %v1600
    %v1975 = vunpack.c.l.b16 %v1601
    %v1976 = vunpack.c.h.b16 %v1601
    %v1977 = vunpack.c.l.b16 %v1602
    %v1978 = vunpack.c.h.b16 %v1602
    %v1979 = vunpack.c.l.b16 %v1603
    %v1980 = vunpack.c.h.b16 %v1603
    %v1981 = vunpack.c.l.b16 %v1604
    %v1982 = vunpack.c.h.b16 %v1604
    %v1983 = vunpack.c.l.b16 %v1605
    %v1984 = vunpack.c.h.b16 %v1605
    %v1985 = vunpack.c.l.b16 %v1606
    %v1986 = vunpack.c.h.b16 %v1606
    %v1987 = vunpack.c.l.b16 %v1607
    %v1988 = vunpack.c.h.b16 %v1607
    %v1989 = vunpack.c.l.b16 %v1608
    %v1990 = vunpack.c.h.b16 %v1608
    %v1991 = vunpack.c.l.b16 %v1609
    %v1992 = vunpack.c.h.b16 %v1609
    %v1993 = vunpack.c.l.b16 %v1610
    %v1994 = vunpack.c.h.b16 %v1610
    %v1995 = vunpack.c.l.b16 %v1611
    %v1996 = vunpack.c.h.b16 %v1611
    %v1997 = vunpack.c.l.b16 %v1612
    %v1998 = vunpack.c.h.b16 %v1612
    %v1999 = vunpack.c.l.b16 %v1613
    %v2000 = vunpack.c.h.b16 %v1613
    %v2001 = vunpack.c.l.b16 %v1614
    %v2002 = vunpack.c.h.b16 %v1614
    %v2003 = vunpack.c.l.b16 %v1615
    %v2004 = vunpack.c.h.b16 %v1615
    %v2005 = vunpack.c.l.b16 %v1616
    %v2006 = vunpack.c.h.b16 %v1616
    %v2007 = vunpack.c.l.b16 %v1617
    %v2008 = vunpack.c.h.b16 %v1617
    %v2009 = vunpack.c.l.b16 %v1618
    %v2010 = vunpack.c.h.b16 %v1618
    %v2011 = vunpack.c.l.b16 %v1619
    %v2012 = vunpack.c.h.b16 %v1619
    %v2013 = vunpack.c.l.b16 %v1620
    %v2014 = vunpack.c.h.b16 %v1620
    %v2015 = vpack.c.b16 %v1763, %v1759
    %v2016 = vpack.c.b16 %v1764, %v1760
    %v2017 = vpack.c.b16 %v1765, %v1761
    %v2018 = vpack.c.b16 %v1766, %v1762
    %v2019 = vpack.c.b16 %v1771, %v1767
    %v2020 = vpack.c.b16 %v1772, %v1768
    %v2021 = vpack.c.b16 %v1773, %v1769
    %v2022 = vpack.c.b16 %v1774, %v1770
    %v2023 = vpack.c.b16 %v1779, %v1775
    %v2024 = vpack.c.b16 %v1780, %v1776
    %v2025 = vpack.c.b16 %v1781, %v1777
    %v2026 = vpack.c.b16 %v1782, %v1778
    %v2027 = vpack.c.b16 %v1787, %v1783
    %v2028 = vpack.c.b16 %v1788, %v1784
    %v2029 = vpack.c.b16 %v1789, %v1785
    %v2030 = vpack.c.b16 %v1790, %v1786
    %v2031 = vpack.c.b16 %v1795, %v1791
    %v2032 = vpack.c.b16 %v1796, %v1792
    %v2033 = vpack.c.b16 %v1797, %v1793
    %v2034 = vpack.c.b16 %v1798, %v1794
    %v2035 = vpack.c.b16 %v1803, %v1799
    %v2036 = vpack.c.b16 %v1804, %v1800
    %v2037 = vpack.c.b16 %v1805, %v1801
    %v2038 = vpack.c.b16 %v1806, %v1802
    %v2039 = vpack.c.b16 %v1811, %v1807
    %v2040 = vpack.c.b16 %v1812, %v1808
    %v2041 = vpack.c.b16 %v1813, %v1809
    %v2042 = vpack.c.b16 %v1814, %v1810
    %v2043 = vpack.c.b16 %v1819, %v1815
    %v2044 = vpack.c.b16 %v1820, %v1816
    %v2045 = vpack.c.b16 %v1821, %v1817
    %v2046 = vpack.c.b16 %v1822, %v1818
    %v2047 = vpack.c.b16 %v1827, %v1823
    %v2048 = vpack.c.b16 %v1828, %v1824
    %v2049 = vpack.c.b16 %v1829, %v1825
    %v2050 = vpack.c.b16 %v1830, %v1826
    %v2051 = vpack.c.b16 %v1835, %v1831
    %v2052 = vpack.c.b16 %v1836, %v1832
    %v2053 = vpack.c.b16 %v1837, %v1833
    %v2054 = vpack.c.b16 %v1838, %v1834
    %v2055 = vpack.c.b16 %v1843, %v1839
    %v2056 = vpack.c.b16 %v1844, %v1840
    %v2057 = vpack.c.b16 %v1845, %v1841
    %v2058 = vpack.c.b16 %v1846, %v1842
    %v2059 = vpack.c.b16 %v1851, %v1847
    %v2060 = vpack.c.b16 %v1852, %v1848
    %v2061 = vpack.c.b16 %v1853, %v1849
    %v2062 = vpack.c.b16 %v1854, %v1850
    %v2063 = vpack.c.b16 %v1859, %v1855
    %v2064 = vpack.c.b16 %v1860, %v1856
    %v2065 = vpack.c.b16 %v1861, %v1857
    %v2066 = vpack.c.b16 %v1862, %v1858
    %v2067 = vpack.c.b16 %v1867, %v1863
    %v2068 = vpack.c.b16 %v1868, %v1864
    %v2069 = vpack.c.b16 %v1869, %v1865
    %v2070 = vpack.c.b16 %v1870, %v1866
    %v2071 = vpack.c.b16 %v1875, %v1871
    %v2072 = vpack.c.b16 %v1876, %v1872
    %v2073 = vpack.c.b16 %v1877, %v1873
    %v2074 = vpack.c.b16 %v1878, %v1874
    %v2075 = vpack.c.b16 %v1883, %v1879
    %v2076 = vpack.c.b16 %v1884, %v1880
    %v2077 = vpack.c.b16 %v1885, %v1881
    %v2078 = vpack.c.b16 %v1886, %v1882
    %v2079 = vpack.c.b16 %v1891, %v1887
    %v2080 = vpack.c.b16 %v1892, %v1888
    %v2081 = vpack.c.b16 %v1893, %v1889
    %v2082 = vpack.c.b16 %v1894, %v1890
    %v2083 = vpack.c.b16 %v1899, %v1895
    %v2084 = vpack.c.b16 %v1900, %v1896
    %v2085 = vpack.c.b16 %v1901, %v1897
    %v2086 = vpack.c.b16 %v1902, %v1898
    %v2087 = vpack.c.b16 %v1907, %v1903
    %v2088 = vpack.c.b16 %v1908, %v1904
    %v2089 = vpack.c.b16 %v1909, %v1905
    %v2090 = vpack.c.b16 %v1910, %v1906
    %v2091 = vpack.c.b16 %v1915, %v1911
    %v2092 = vpack.c.b16 %v1916, %v1912
    %v2093 = vpack.c.b16 %v1917, %v1913
    %v2094 = vpack.c.b16 %v1918, %v1914
    %v2095 = vpack.c.b16 %v1923, %v1919
    %v2096 = vpack.c.b16 %v1924, %v1920
    %v2097 = vpack.c.b16 %v1925, %v1921
    %v2098 = vpack.c.b16 %v1926, %v1922
    %v2099 = vpack.c.b16 %v1931, %v1927
    %v2100 = vpack.c.b16 %v1932, %v1928
    %v2101 = vpack.c.b16 %v1933, %v1929
    %v2102 = vpack.c.b16 %v1934, %v1930
    %v2103 = vpack.c.b16 %v1939, %v1935
    %v2104 = vpack.c.b16 %v1940, %v1936
    %v2105 = vpack.c.b16 %v1941, %v1937
    %v2106 = vpack.c.b16 %v1942, %v1938
    %v2107 = vpack.c.b16 %v1947, %v1943
    %v2108 = vpack.c.b16 %v1948, %v1944
    %v2109 = vpack.c.b16 %v1949, %v1945
    %v2110 = vpack.c.b16 %v1950, %v1946
    %v2111 = vpack.c.b16 %v1955, %v1951
    %v2112 = vpack.c.b16 %v1956, %v1952
    %v2113 = vpack.c.b16 %v1957, %v1953
    %v2114 = vpack.c.b16 %v1958, %v1954
    %v2115 = vpack.c.b16 %v1963, %v1959
    %v2116 = vpack.c.b16 %v1964, %v1960
    %v2117 = vpack.c.b16 %v1965, %v1961
    %v2118 = vpack.c.b16 %v1966, %v1962
    %v2119 = vpack.c.b16 %v1971, %v1967
    %v2120 = vpack.c.b16 %v1972, %v1968
    %v2121 = vpack.c.b16 %v1973, %v1969
    %v2122 = vpack.c.b16 %v1974, %v1970
    %v2123 = vpack.c.b16 %v1979, %v1975
    %v2124 = vpack.c.b16 %v1980, %v1976
    %v2125 = vpack.c.b16 %v1981, %v1977
    %v2126 = vpack.c.b16 %v1982, %v1978
    %v2127 = vpack.c.b16 %v1987, %v1983
    %v2128 = vpack.c.b16 %v1988, %v1984
    %v2129 = vpack.c.b16 %v1989, %v1985
    %v2130 = vpack.c.b16 %v1990, %v1986
    %v2131 = vpack.c.b16 %v1995, %v1991
    %v2132 = vpack.c.b16 %v1996, %v1992
    %v2133 = vpack.c.b16 %v1997, %v1993
    %v2134 = vpack.c.b16 %v1998, %v1994
    %v2135 = vpack.c.b16 %v2003, %v1999
    %v2136 = vpack.c.b16 %v2004, %v2000
    %v2137 = vpack.c.b16 %v2005, %v2001
    %v2138 = vpack.c.b16 %v2006, %v2002
    %v2139 = vpack.c.b16 %v2011, %v2007
    %v2140 = vpack.c.b16 %v2012, %v2008
    %v2141 = vpack.c.b16 %v2013, %v2009
    %v2142 = vpack.c.b16 %v2014, %v2010
    %2271 = vmatpush.bf16.msra.mxu0 %v2043
    %2272 = vmatpush.bf16.msra.mxu0 %v2039
    %2273 = vmatpush.bf16.msra.mxu0 %v2035
    %2274 = vmatpush.bf16.msra.mxu0 %v2031
    %2275 = vmatpush.bf16.msra.mxu0 %v2027
    %2276 = vmatpush.bf16.msra.mxu0 %v2023
    %2277 = vmatpush.bf16.msra.mxu0 %v2019
    %2278 = vmatpush.bf16.msra.mxu0 %v2015
    %2279 = vmatmul.bf16.gmra.mxu0 %v1488
    %v2280 = vpop.f32.mrf.mxu0
    %v2281 = vadd.f32 %v1623, %v2280
    %v2282 = vpop.f32.mrf.mxu0
    %2283 = vdwg.mxu0
    %2284 = vmatpush.bf16.msra.mxu0 %v2075
    %2285 = vmatpush.bf16.msra.mxu0 %v2071
    %2286 = vmatpush.bf16.msra.mxu0 %v2067
    %2287 = vmatpush.bf16.msra.mxu0 %v2063
    %2288 = vmatpush.bf16.msra.mxu0 %v2059
    %2289 = vmatpush.bf16.msra.mxu0 %v2055
    %2290 = vmatpush.bf16.msra.mxu0 %v2051
    %2291 = vmatpush.bf16.msra.mxu0 %v2047
    %2292 = vmatmul.bf16.gmra.mxu0 %v1489
    %v2293 = vpop.f32.mrf.mxu0
    %v2294 = vadd.f32 %v2281, %v2293
    %v2295 = vpop.f32.mrf.mxu0
    %2296 = vdwg.mxu0
    %2297 = vmatpush.bf16.msra.mxu0 %v2107
    %2298 = vmatpush.bf16.msra.mxu0 %v2103
    %2299 = vmatpush.bf16.msra.mxu0 %v2099
    %2300 = vmatpush.bf16.msra.mxu0 %v2095
    %2301 = vmatpush.bf16.msra.mxu0 %v2091
    %2302 = vmatpush.bf16.msra.mxu0 %v2087
    %2303 = vmatpush.bf16.msra.mxu0 %v2083
    %2304 = vmatpush.bf16.msra.mxu0 %v2079
    %2305 = vmatmul.bf16.gmra.mxu0 %v1490
    %v2306 = vpop.f32.mrf.mxu0
    %v2307 = vadd.f32 %v2294, %v2306
    %v2308 = vpop.f32.mrf.mxu0
    %2309 = vdwg.mxu0
    %2310 = vmatpush.bf16.msra.mxu0 %v2139
    %2311 = vmatpush.bf16.msra.mxu0 %v2135
    %2312 = vmatpush.bf16.msra.mxu0 %v2131
    %2313 = vmatpush.bf16.msra.mxu0 %v2127
    %2314 = vmatpush.bf16.msra.mxu0 %v2123
    %2315 = vmatpush.bf16.msra.mxu0 %v2119
    %2316 = vmatpush.bf16.msra.mxu0 %v2115
    %2317 = vmatpush.bf16.msra.mxu0 %v2111
    %2318 = vmatmul.bf16.gmra.mxu0 %v1491
    %v2319 = vpop.f32.mrf.mxu0
    %v2320 = vadd.f32 %v2307, %v2319
    %v2321 = vpop.f32.mrf.mxu0
    %2322 = vdwg.mxu0
    %2323 = vmatpush.bf16.msra.mxu0 %v2044
    %2324 = vmatpush.bf16.msra.mxu0 %v2040
    %2325 = vmatpush.bf16.msra.mxu0 %v2036
    %2326 = vmatpush.bf16.msra.mxu0 %v2032
    %2327 = vmatpush.bf16.msra.mxu0 %v2028
    %2328 = vmatpush.bf16.msra.mxu0 %v2024
    %2329 = vmatpush.bf16.msra.mxu0 %v2020
    %2330 = vmatpush.bf16.msra.mxu0 %v2016
    %2331 = vmatmul.bf16.gmra.mxu0 %v1488
    %v2332 = vpop.f32.mrf.mxu0
    %v2333 = vadd.f32 %v1624, %v2332
    %v2334 = vpop.f32.mrf.mxu0
    %2335 = vdwg.mxu0
    %2336 = vmatpush.bf16.msra.mxu0 %v2076
    %2337 = vmatpush.bf16.msra.mxu0 %v2072
    %2338 = vmatpush.bf16.msra.mxu0 %v2068
    %2339 = vmatpush.bf16.msra.mxu0 %v2064
    %2340 = vmatpush.bf16.msra.mxu0 %v2060
    %2341 = vmatpush.bf16.msra.mxu0 %v2056
    %2342 = vmatpush.bf16.msra.mxu0 %v2052
    %2343 = vmatpush.bf16.msra.mxu0 %v2048
    %2344 = vmatmul.bf16.gmra.mxu0 %v1489
    %v2345 = vpop.f32.mrf.mxu0
    %v2346 = vadd.f32 %v2333, %v2345
    %v2347 = vpop.f32.mrf.mxu0
    %2348 = vdwg.mxu0
    %2349 = vmatpush.bf16.msra.mxu0 %v2108
    %2350 = vmatpush.bf16.msra.mxu0 %v2104
    %2351 = vmatpush.bf16.msra.mxu0 %v2100
    %2352 = vmatpush.bf16.msra.mxu0 %v2096
    %2353 = vmatpush.bf16.msra.mxu0 %v2092
    %2354 = vmatpush.bf16.msra.mxu0 %v2088
    %2355 = vmatpush.bf16.msra.mxu0 %v2084
    %2356 = vmatpush.bf16.msra.mxu0 %v2080
    %2357 = vmatmul.bf16.gmra.mxu0 %v1490
    %v2358 = vpop.f32.mrf.mxu0
    %v2359 = vadd.f32 %v2346, %v2358
    %v2360 = vpop.f32.mrf.mxu0
    %2361 = vdwg.mxu0
    %2362 = vmatpush.bf16.msra.mxu0 %v2140
    %2363 = vmatpush.bf16.msra.mxu0 %v2136
    %2364 = vmatpush.bf16.msra.mxu0 %v2132
    %2365 = vmatpush.bf16.msra.mxu0 %v2128
    %2366 = vmatpush.bf16.msra.mxu0 %v2124
    %2367 = vmatpush.bf16.msra.mxu0 %v2120
    %2368 = vmatpush.bf16.msra.mxu0 %v2116
    %2369 = vmatpush.bf16.msra.mxu0 %v2112
    %2370 = vmatmul.bf16.gmra.mxu0 %v1491
    %v2371 = vpop.f32.mrf.mxu0
    %v2372 = vadd.f32 %v2359, %v2371
    %v2373 = vpop.f32.mrf.mxu0
    %2374 = vdwg.mxu0
    %2375 = vmatpush.bf16.msra.mxu0 %v2045
    %2376 = vmatpush.bf16.msra.mxu0 %v2041
    %2377 = vmatpush.bf16.msra.mxu0 %v2037
    %2378 = vmatpush.bf16.msra.mxu0 %v2033
    %2379 = vmatpush.bf16.msra.mxu0 %v2029
    %2380 = vmatpush.bf16.msra.mxu0 %v2025
    %2381 = vmatpush.bf16.msra.mxu0 %v2021
    %2382 = vmatpush.bf16.msra.mxu0 %v2017
    %2383 = vmatmul.bf16.gmra.mxu0 %v1488
    %v2384 = vpop.f32.mrf.mxu0
    %v2385 = vadd.f32 %v1625, %v2384
    %v2386 = vpop.f32.mrf.mxu0
    %2387 = vdwg.mxu0
    %2388 = vmatpush.bf16.msra.mxu0 %v2077
    %2389 = vmatpush.bf16.msra.mxu0 %v2073
    %2390 = vmatpush.bf16.msra.mxu0 %v2069
    %2391 = vmatpush.bf16.msra.mxu0 %v2065
    %2392 = vmatpush.bf16.msra.mxu0 %v2061
    %2393 = vmatpush.bf16.msra.mxu0 %v2057
    %2394 = vmatpush.bf16.msra.mxu0 %v2053
    %2395 = vmatpush.bf16.msra.mxu0 %v2049
    %2396 = vmatmul.bf16.gmra.mxu0 %v1489
    %v2397 = vpop.f32.mrf.mxu0
    %v2398 = vadd.f32 %v2385, %v2397
    %v2399 = vpop.f32.mrf.mxu0
    %2400 = vdwg.mxu0
    %2401 = vmatpush.bf16.msra.mxu0 %v2109
    %2402 = vmatpush.bf16.msra.mxu0 %v2105
    %2403 = vmatpush.bf16.msra.mxu0 %v2101
    %2404 = vmatpush.bf16.msra.mxu0 %v2097
    %2405 = vmatpush.bf16.msra.mxu0 %v2093
    %2406 = vmatpush.bf16.msra.mxu0 %v2089
    %2407 = vmatpush.bf16.msra.mxu0 %v2085
    %2408 = vmatpush.bf16.msra.mxu0 %v2081
    %2409 = vmatmul.bf16.gmra.mxu0 %v1490
    %v2410 = vpop.f32.mrf.mxu0
    %v2411 = vadd.f32 %v2398, %v2410
    %v2412 = vpop.f32.mrf.mxu0
    %2413 = vdwg.mxu0
    %2414 = vmatpush.bf16.msra.mxu0 %v2141
    %2415 = vmatpush.bf16.msra.mxu0 %v2137
    %2416 = vmatpush.bf16.msra.mxu0 %v2133
    %2417 = vmatpush.bf16.msra.mxu0 %v2129
    %2418 = vmatpush.bf16.msra.mxu0 %v2125
    %2419 = vmatpush.bf16.msra.mxu0 %v2121
    %2420 = vmatpush.bf16.msra.mxu0 %v2117
    %2421 = vmatpush.bf16.msra.mxu0 %v2113
    %2422 = vmatmul.bf16.gmra.mxu0 %v1491
    %v2423 = vpop.f32.mrf.mxu0
    %v2424 = vadd.f32 %v2411, %v2423
    %v2425 = vpop.f32.mrf.mxu0
    %2426 = vdwg.mxu0
    %2427 = vmatpush.bf16.msra.mxu0 %v2046
    %2428 = vmatpush.bf16.msra.mxu0 %v2042
    %2429 = vmatpush.bf16.msra.mxu0 %v2038
    %2430 = vmatpush.bf16.msra.mxu0 %v2034
    %2431 = vmatpush.bf16.msra.mxu0 %v2030
    %2432 = vmatpush.bf16.msra.mxu0 %v2026
    %2433 = vmatpush.bf16.msra.mxu0 %v2022
    %2434 = vmatpush.bf16.msra.mxu0 %v2018
    %2435 = vmatmul.bf16.gmra.mxu0 %v1488
    %v2436 = vpop.f32.mrf.mxu0
    %v2437 = vadd.f32 %v1626, %v2436
    %v2438 = vpop.f32.mrf.mxu0
    %2439 = vdwg.mxu0
    %2440 = vmatpush.bf16.msra.mxu0 %v2078
    %2441 = vmatpush.bf16.msra.mxu0 %v2074
    %2442 = vmatpush.bf16.msra.mxu0 %v2070
    %2443 = vmatpush.bf16.msra.mxu0 %v2066
    %2444 = vmatpush.bf16.msra.mxu0 %v2062
    %2445 = vmatpush.bf16.msra.mxu0 %v2058
    %2446 = vmatpush.bf16.msra.mxu0 %v2054
    %2447 = vmatpush.bf16.msra.mxu0 %v2050
    %2448 = vmatmul.bf16.gmra.mxu0 %v1489
    %v2449 = vpop.f32.mrf.mxu0
    %v2450 = vadd.f32 %v2437, %v2449
    %v2451 = vpop.f32.mrf.mxu0
    %2452 = vdwg.mxu0
    %2453 = vmatpush.bf16.msra.mxu0 %v2110
    %2454 = vmatpush.bf16.msra.mxu0 %v2106
    %2455 = vmatpush.bf16.msra.mxu0 %v2102
    %2456 = vmatpush.bf16.msra.mxu0 %v2098
    %2457 = vmatpush.bf16.msra.mxu0 %v2094
    %2458 = vmatpush.bf16.msra.mxu0 %v2090
    %2459 = vmatpush.bf16.msra.mxu0 %v2086
    %2460 = vmatpush.bf16.msra.mxu0 %v2082
    %2461 = vmatmul.bf16.gmra.mxu0 %v1490
    %v2462 = vpop.f32.mrf.mxu0
    %v2463 = vadd.f32 %v2450, %v2462
    %v2464 = vpop.f32.mrf.mxu0
    %2465 = vdwg.mxu0
    %2466 = vmatpush.bf16.msra.mxu0 %v2142
    %2467 = vmatpush.bf16.msra.mxu0 %v2138
    %2468 = vmatpush.bf16.msra.mxu0 %v2134
    %2469 = vmatpush.bf16.msra.mxu0 %v2130
    %2470 = vmatpush.bf16.msra.mxu0 %v2126
    %2471 = vmatpush.bf16.msra.mxu0 %v2122
    %2472 = vmatpush.bf16.msra.mxu0 %v2118
    %2473 = vmatpush.bf16.msra.mxu0 %v2114
    %2474 = vmatmul.bf16.gmra.mxu0 %v1491
    %v2475 = vpop.f32.mrf.mxu0
    %v2476 = vadd.f32 %v2463, %v2475
    %v2477 = vpop.f32.mrf.mxu0
    %2478 = vdwg.mxu0
    %v2479 = vmax.f32 %v1329, 0.0
    %v2480 = vmax.f32 %v1381, 0.0
    %v2481 = vmax.f32 %v1433, 0.0
    %v2482 = vmax.f32 %v1485, 0.0
    %v2483 = vmax.f32 %v2320, 0.0
    %v2484 = vmax.f32 %v2372, 0.0
    %v2485 = vmax.f32 %v2424, 0.0
    %v2486 = vmax.f32 %v2476, 0.0
    %v2487 = vld [vmem:[#allocation14] ss:$2 sm:$0xf]
    %v2489 = vperm.slane %v2487, 0
    %v2490 = vperm.slane %v2487, 1
    %v2491 = vperm.slane %v2487, 2
    %v2492 = vperm.slane %v2487, 3
    %v2497 = vmul.f32 %v2479, %v2489
    %v2498 = vmul.f32 %v2480, %v2490
    %v2499 = vmul.f32 %v2481, %v2491
    %v2500 = vmul.f32 %v2482, %v2492
    %vm2501 = vcmask 1041408
    %v2502 = vsel %vm2501, %v2497, 0.0
    %v2503 = vsel %vm2501, %v2498, 0.0
    %v2504 = vadd.f32 %v2502, %v2503
    %v2505 = vsel %vm2501, %v2499, 0.0
    %v2506 = vadd.f32 %v2504, %v2505
    %v2507 = vsel %vm2501, %v2500, 0.0
    %v2508 = vadd.f32 %v2506, %v2507
    %2509 = vadd.xlane.f32.xlu0 %v2508
    %v2510 = vpop.xlane.xlu0 %2509
    %s2511 = scalar_lea.vmem [#allocation14], 1
    %v2512 = vld [vmem:[%s2511] ss:$2 sm:$0xf]
    %v2514 = vperm.slane %v2512, 0
    %v2515 = vperm.slane %v2512, 1
    %v2516 = vperm.slane %v2512, 2
    %v2517 = vperm.slane %v2512, 3
    %v2522 = vmul.f32 %v2483, %v2514
    %v2523 = vmul.f32 %v2484, %v2515
    %v2524 = vmul.f32 %v2485, %v2516
    %v2525 = vmul.f32 %v2486, %v2517
    %v2526 = vsel %vm2501, %v2522, 0.0
    %v2527 = vsel %vm2501, %v2523, 0.0
    %v2528 = vadd.f32 %v2526, %v2527
    %v2529 = vsel %vm2501, %v2524, 0.0
    %v2530 = vadd.f32 %v2528, %v2529
    %v2531 = vsel %vm2501, %v2525, 0.0
    %v2532 = vadd.f32 %v2530, %v2531
    %2533 = vadd.xlane.f32.xlu0 %v2532
    %v2534 = vpop.xlane.xlu0 %2533
    %vm2535 = vcmask 7168
    %v2536 = vsel %vm2535, %v2510, %v2534
    %v2537 = vld [vmem:[%s8] sm:$0x1]
    %v2539 = vperm.slane %v2537, 0
    %v2541 = vadd.f32 %v2536, %v2539
    %vm2542 = vcmask 9216
    %2543 = vst.msk [vmem:[#allocation16] sm:$0x3] %vm2542, %v2541
    // Predicated region
    $region70: #{tpu_custom_call.1} parent=1 // pred_check
      _
    $region71: #{tpu_custom_call.1} parent=1 // pred_check_branch
      %2545 = sbr.rel (0) target = $region73
    $region72: #{tpu_custom_call.1} parent=1 // pred_region
      %2547 = vsyncadd [#allocation4], 0
      %s2549 = sshll.u32 [#allocation16], 4
      %s2550 = int_to_ptr.vmem [resolvable:$true] %s2549
      %s2551 = sshll.u32 %s9, 4
      %s2552 = int_to_ptr.hbm [resolvable:$true] %s2551
      %2554 = dma.vmem_to_hbm [thread:$0]  %s2550, 32, %s2552, [#allocation4]
    $region73: #{tpu_custom_call.1} parent=1 // pred_fallthru
      _
    // Predicated region
    $region74: #{tpu_custom_call.1} parent=1 // pred_check
      _
    $region75: #{tpu_custom_call.1} parent=1 // pred_check_branch
      %2556 = sbr.rel (0) target = $region77
    $region76: #{tpu_custom_call.1} parent=1 // pred_region
      %2558 = dma.done [#allocation4], 32
    $region77: #{tpu_custom_call.1} parent=1 // pred_fallthru
      _
    %2559 = vsyncpa [#allocation3], 1
    %2560 = vsyncpa [#allocation6], 1
    %2561 = vsyncpa [#allocation9], 1
    %2562 = vsyncpa [#allocation12], 1
    %2563 = vsyncpa [#allocation15], 1
    %2564 = vsyncpa [#allocation4], 1

</llo_original>
